<compile_context>
chip_gen: v7x
topology: tpu7x:2x2x1
jax: 0.10.0
libtpu: 0.0.40
codegen_flags: <defaults>
</compile_context>

<pallas_src>
import functools

import jax
import jax.numpy as jnp
from jax import lax
from jax.experimental import pallas as pl
from jax.experimental.pallas import tpu as pltpu


# ----------------------------------------------------------------------------
# Kernel
# ----------------------------------------------------------------------------
def _bottleneck_b_kernel(x_hbm, w1_ref, b1_ref, w2_ref, b2_ref, w3_ref, b3_ref,
                         we_ref, be_ref, o_ref,
                         xbuf, dma_sem, pad_ref, col_ref,
                         *, W, TH, Cin_p, Cmid_p):
    n = pl.program_id(0)          # batch element
    i = pl.program_id(1)          # row tile
    num_tiles = pl.num_programs(1)
    slot = i % 2
    mm_dtype = w1_ref.dtype

    # ---- manual double-buffered fetch of the halo'd x slab ------------------
    # x_hbm is (N, H+4, W, Cin_p) (2 zero rows top/bottom added on the host).
    # Tile i needs padded rows [i*TH, i*TH + TH + 4).
    def slab_copy(tile, buf_slot):
        return pltpu.make_async_copy(
            x_hbm.at[n, pl.ds(tile * TH, TH + 4), :, :],
            xbuf.at[buf_slot],
            dma_sem.at[buf_slot])

    @pl.when(i == 0)
    def _():                       # first tile of this (core, n): prime slot 0
        slab_copy(0, 0).start()

    slab_copy(i, slot).wait()

    @pl.when(i + 1 < num_tiles)    # prefetch next tile of the SAME n
    def _():
        slab_copy(i + 1, 1 - slot).start()

    x2 = xbuf[slot].reshape((TH + 4) * W, Cin_p)       # ((TH+4)*W, Cin_p)

    # ---- conv1 (1x1) + folded bn1 + relu over the halo'd slab ----------------
    t1 = jnp.dot(x2, w1_ref[...], preferred_element_type=jnp.float32)
    t1 = jnp.maximum(t1 + b1_ref[...], 0.0)            # f32

    # ---- stage t1 into the zero-padded conv2 input scratch (mm_dtype) --------
    zc = jnp.zeros((TH + 4, 2, Cmid_p), mm_dtype)
    pad_ref[:, 0:2, :] = zc
    pad_ref[:, W + 2:W + 4, :] = zc
    pad_ref[:, 2:2 + W, :] = t1.reshape(TH + 4, W, Cmid_p).astype(mm_dtype)

    # Halo rows outside the image are conv2 zero-padding, not relu(b1):
    # only the first / last row tile touches them.
    zr = jnp.zeros((2, W + 4, Cmid_p), mm_dtype)

    @pl.when(i == 0)
    def _():
        pad_ref[0:2, :, :] = zr

    @pl.when(i == num_tiles - 1)
    def _():
        pad_ref[TH + 2:TH + 4, :, :] = zr

    # ---- im2col for the dilated 3x3 (dilation=2, padding=2) ------------------
    # Column blocks are lane-aligned (Cmid_p is a multiple of 128).
    for ky in range(3):
        for kx in range(3):
            k = ky * 3 + kx
            tap = pad_ref[2 * ky:2 * ky + TH, 2 * kx:2 * kx + W, :]
            col_ref[:, k * Cmid_p:(k + 1) * Cmid_p] = tap.reshape(TH * W, Cmid_p)

    # ---- conv2 as a single matmul (K = 9*Cmid_p) + bn2 + relu -----------------
    t2 = jnp.dot(col_ref[...], w2_ref[...], preferred_element_type=jnp.float32)
    t2 = jnp.maximum(t2 + b2_ref[...], 0.0)             # (TH*W, Cmid_p)

    # ---- conv3 (1x1) + bn3 ----------------------------------------------------
    t3 = jnp.dot(t2.astype(mm_dtype), w3_ref[...],
                 preferred_element_type=jnp.float32) + b3_ref[...]

    # ---- extra_conv residual branch (1x1 + bn) on the slab's center rows ------
    x_center = x2[2 * W:(2 + TH) * W]                   # rows of the actual tile
    r = jnp.dot(x_center, we_ref[...],
                preferred_element_type=jnp.float32) + be_ref[...]

    # ---- add + relu, lane-dense store (Cout_p multiple of 128) ----------------
    o_ref[0] = jnp.maximum(t3 + r, 0.0)


# ----------------------------------------------------------------------------
# Host-side parameter preparation: fold BN, pad channels to 128, im2col w2.
# ----------------------------------------------------------------------------
def _fold_bn(gamma, beta, mean, var, eps=1e-5):
    scale = gamma / jnp.sqrt(var + eps)
    bias = beta - mean * scale
    return scale, bias


def _round_up(x, m):
    return (x + m - 1) // m * m


def pack_params(w1_oihw, bn1, w2_oihw, bn2, w3_oihw, bn3, we_oihw, bne,
                matmul_dtype=jnp.bfloat16, eps=1e-5):
    Cmid, Cin = w1_oihw.shape[0], w1_oihw.shape[1]
    Cout = w3_oihw.shape[0]
    Cin_p = _round_up(Cin, 128)
    Cmid_p = _round_up(Cmid, 128)
    Cout_p = _round_up(Cout, 128)

    s1, b1 = _fold_bn(*bn1, eps)
    s2, b2 = _fold_bn(*bn2, eps)
    s3, b3 = _fold_bn(*bn3, eps)
    se, be = _fold_bn(*bne, eps)

    # 1x1 convs -> (Cin, Cout) matmuls; BN scale folded into output columns.
    w1 = jnp.transpose(w1_oihw[:, :, 0, 0], (1, 0)) * s1[None, :]        # (Cin, Cmid)
    w3 = jnp.transpose(w3_oihw[:, :, 0, 0], (1, 0)) * s3[None, :]        # (Cmid, Cout)
    we = jnp.transpose(we_oihw[:, :, 0, 0], (1, 0)) * se[None, :]        # (Cin, Cout)
    # 3x3 dilated conv -> (ky, kx, Cin, Cout), BN scale folded.
    w2 = jnp.transpose(w2_oihw, (2, 3, 1, 0)) * s2[None, None, None, :]  # (3,3,Cmid,Cmid)

    # Zero-pad channels to multiples of 128 (padded lanes contribute exactly 0).
    w1p = jnp.zeros((Cin_p, Cmid_p), jnp.float32).at[:Cin, :Cmid].set(w1)
    w2p = (jnp.zeros((3, 3, Cmid_p, Cmid_p), jnp.float32)
           .at[:, :, :Cmid, :Cmid].set(w2)
           .reshape(9 * Cmid_p, Cmid_p))                                 # im2col layout
    w3p = jnp.zeros((Cmid_p, Cout_p), jnp.float32).at[:Cmid, :Cout].set(w3)
    wep = jnp.zeros((Cin_p, Cout_p), jnp.float32).at[:Cin, :Cout].set(we)

    b1p = jnp.zeros((1, Cmid_p), jnp.float32).at[0, :Cmid].set(b1)
    b2p = jnp.zeros((1, Cmid_p), jnp.float32).at[0, :Cmid].set(b2)
    b3p = jnp.zeros((1, Cout_p), jnp.float32).at[0, :Cout].set(b3)
    bep = jnp.zeros((1, Cout_p), jnp.float32).at[0, :Cout].set(be)

    md = matmul_dtype
    return (w1p.astype(md), b1p, w2p.astype(md), b2p,
            w3p.astype(md), b3p, wep.astype(md), bep)


# ----------------------------------------------------------------------------
# Row-tile picker: largest divisor of H whose per-step VMEM fits the budget.
# ----------------------------------------------------------------------------
def _pick_row_tile(H, W, Cin_p, Cmid_p, Cout_p, itemsize, budget_bytes):
    def per_step_bytes(th):
        return (2 * (th + 4) * W * Cin_p * itemsize        # x slab double buffer
                + (th + 4) * (W + 4) * Cmid_p * itemsize   # padded t1
                + th * W * 9 * Cmid_p * itemsize           # im2col
                + 2 * th * W * Cout_p * 4)                 # out block x2 buffers

    cands = [th for th in range(1, H + 1)
             if H % th == 0 and (th == H or (th * W) % 8 == 0)]
    fitting = [th for th in cands if per_step_bytes(th) <= budget_bytes]
    return max(fitting) if fitting else min(cands)


# ----------------------------------------------------------------------------
# Wrapper
# ----------------------------------------------------------------------------
def bottleneck_b_pallas(x_nchw, packed, *, cout, cmid=None, row_tile=None,
                        step_vmem_budget_bytes=16 << 20):
    """BottleneckB forward.  x_nchw: (N, Cin, H, W) -> (N, cout, H, W) f32."""
    (w1, b1, w2, b2, w3, b3, we, be) = packed
    N, Cin, H, W = x_nchw.shape
    mm_dtype = w1.dtype
    Cin_p, Cmid_p = w1.shape
    Cout_p = w3.shape[1]
    if cmid is None:
        cmid = Cmid_p
    itemsize = jnp.dtype(mm_dtype).itemsize

    if row_tile is None:
        TH = _pick_row_tile(H, W, Cin_p, Cmid_p, Cout_p, itemsize,
                            step_vmem_budget_bytes)
    else:
        TH = int(row_tile)
        if H % TH != 0 or (TH != H and (TH * W) % 8 != 0):
            raise ValueError("row_tile must divide H and give 8-aligned row blocks")
    num_tiles = H // TH

    # Channel-last, pad channels to Cin_p (lane-dense DMA / matmul K) and add
    # the 2-row zero halo top/bottom once on the host.
    x = jnp.transpose(x_nchw, (0, 2, 3, 1)).astype(mm_dtype)
    x = jnp.pad(x, ((0, 0), (2, 2), (0, 0), (0, Cin_p - Cin)))   # (N, H+4, W, Cin_p)

    kernel = functools.partial(_bottleneck_b_kernel, W=W, TH=TH,
                               Cin_p=Cin_p, Cmid_p=Cmid_p)

    weight_specs = [pl.BlockSpec(a.shape, lambda n, i: (0, 0)) for a in packed]

    # Explicit VMEM limit from the actual buffers (+25% headroom, >= default).
    per_step = (2 * (TH + 4) * W * Cin_p * itemsize
                + (TH + 4) * (W + 4) * Cmid_p * itemsize
                + TH * W * 9 * Cmid_p * itemsize
                + 2 * TH * W * Cout_p * 4)
    weight_bytes = 2 * sum(int(a.size) * a.dtype.itemsize for a in packed)
    vmem_limit = int(min(128 << 20,
                         max(32 << 20,
                             int((per_step + weight_bytes) * 1.25) + (4 << 20))))

    # Cost estimate with TRUE channel counts (padded lanes are zero work).
    flops = 2 * N * H * W * (Cin * cmid + 9 * cmid * cmid
                             + cmid * cout + Cin * cout)
    bytes_accessed = (int(x.size) * itemsize + N * H * W * Cout_p * 4
                      + sum(int(a.size) * a.dtype.itemsize for a in packed))
    cost = pl.CostEstimate(flops=int(flops), transcendentals=0,
                           bytes_accessed=int(bytes_accessed))

    out_flat = pl.pallas_call(
        kernel,
        out_shape=jax.ShapeDtypeStruct((N, H * W, Cout_p), jnp.float32),
        grid_spec=pltpu.PrefetchScalarGridSpec(
            num_scalar_prefetch=0,
            grid=(N, num_tiles),
            in_specs=[pl.BlockSpec(memory_space=pl.ANY)] + weight_specs,
            out_specs=pl.BlockSpec((1, TH * W, Cout_p), lambda n, i: (n, i, 0)),
            scratch_shapes=[
                pltpu.VMEM((2, TH + 4, W, Cin_p), mm_dtype),    # x slab, 2 slots
                pltpu.SemaphoreType.DMA((2,)),
                pltpu.VMEM((TH + 4, W + 4, Cmid_p), mm_dtype),  # padded t1
                pltpu.VMEM((TH * W, 9 * Cmid_p), mm_dtype),     # im2col
            ],
        ),
        compiler_params=pltpu.CompilerParams(
            dimension_semantics=("parallel", "arbitrary"),
            vmem_limit_bytes=vmem_limit),
        cost_estimate=cost,
    )(x, *packed)

    out = out_flat[:, :, :cout].reshape(N, H, W, cout)
    return jnp.transpose(out, (0, 3, 1, 2))


# ----------------------------------------------------------------------------
# Pure-JAX reference (NCHW, PyTorch-style OIHW weights, eval-mode BN)
# ----------------------------------------------------------------------------
def _reference_nchw(x, raw):
    (w1_oihw, bn1, w2_oihw, bn2, w3_oihw, bn3, we_oihw, bne) = raw
    dn = ('NCHW', 'OIHW', 'NCHW')

    def bn(y, p):
        g, b, m, v = p
        return ((y - m[None, :, None, None])
                / jnp.sqrt(v[None, :, None, None] + 1e-5)
                * g[None, :, None, None] + b[None, :, None, None])

    out = lax.conv_general_dilated(x, w1_oihw, (1, 1), 'VALID',
                                   dimension_numbers=dn)
    out = jax.nn.relu(bn(out, bn1))
    out = lax.conv_general_dilated(out, w2_oihw, (1, 1), ((2, 2), (2, 2)),
                                   rhs_dilation=(2, 2), dimension_numbers=dn)
    out = jax.nn.relu(bn(out, bn2))
    out = lax.conv_general_dilated(out, w3_oihw, (1, 1), 'VALID',
                                   dimension_numbers=dn)
    out = bn(out, bn3)
    res = lax.conv_general_dilated(x, we_oihw, (1, 1), 'VALID',
                                   dimension_numbers=dn)
    res = bn(res, bne)
    return jax.nn.relu(out + res)


# ----------------------------------------------------------------------------
# Self-test
# ----------------------------------------------------------------------------
if __name__ == "__main__":
    N, inplanes, planes, H, W = 2, 16, 8, 16, 16
    Cmid, Cout = planes, planes * 4          # 8, 32

    key = jax.random.PRNGKey(0)
    ks = jax.random.split(key, 10)

    x = jax.random.normal(ks[0], (N, inplanes, H, W), jnp.float32)

    # PyTorch-style OIHW conv weights (deterministic, synthetic).
    w1_oihw = jax.random.normal(ks[1], (Cmid, inplanes, 1, 1), jnp.float32) * 0.1
    w2_oihw = jax.random.normal(ks[2], (Cmid, Cmid, 3, 3), jnp.float32) * 0.1
    w3_oihw = jax.random.normal(ks[3], (Cout, Cmid, 1, 1), jnp.float32) * 0.1
    we_oihw = jax.random.normal(ks[4], (Cout, inplanes, 1, 1), jnp.float32) * 0.1

    def bn_params(k, c):
        kg, kb, km, kv = jax.random.split(k, 4)
        gamma = jax.random.uniform(kg, (c,), jnp.float32, 0.5, 1.5)
        beta = jax.random.normal(kb, (c,), jnp.float32) * 0.1
        mean = jax.random.normal(km, (c,), jnp.float32) * 0.1
        var = jax.random.uniform(kv, (c,), jnp.float32, 0.5, 1.5)
        return gamma, beta, mean, var

    bn1 = bn_params(ks[5], Cmid)
    bn2 = bn_params(ks[6], Cmid)
    bn3 = bn_params(ks[7], Cout)
    bne = bn_params(ks[8], Cout)

    raw = (w1_oihw, bn1, w2_oihw, bn2, w3_oihw, bn3, we_oihw, bne)
    ref = jax.block_until_ready(_reference_nchw(x, raw))

    # f32 matmul path, multi-tile (row_tile=4 -> 4 row tiles, exercises the
    # halo fetch / prefetch and the image-border zeroing).  Tight check.
    packed_f32 = pack_params(*raw, matmul_dtype=jnp.float32)
    fn_f32_tiled = jax.jit(functools.partial(
        bottleneck_b_pallas, cout=Cout, cmid=Cmid, row_tile=4))
    out_f32_tiled = jax.block_until_ready(fn_f32_tiled(x, packed_f32))
    assert out_f32_tiled.shape == (N, Cout, H, W)
    if not jnp.allclose(out_f32_tiled, ref, rtol=2e-3, atol=2e-3):
        raise AssertionError("Pallas f32 (tiled) output does not match reference")

    # f32 matmul path, default row tile (picker -> single tile here).
    fn_f32 = jax.jit(functools.partial(bottleneck_b_pallas, cout=Cout, cmid=Cmid))
    out_f32 = jax.block_until_ready(fn_f32(x, packed_f32))
    if not jnp.allclose(out_f32, ref, rtol=2e-3, atol=2e-3):
        raise AssertionError("Pallas f32 output does not match reference")

    # bf16 matmul path (default / fast path on v5e, v6e, v7x), f32 accumulation.
    packed_bf16 = pack_params(*raw, matmul_dtype=jnp.bfloat16)
    fn_bf16 = jax.jit(functools.partial(
        bottleneck_b_pallas, cout=Cout, cmid=Cmid, row_tile=8))
    out_bf16 = jax.block_until_ready(fn_bf16(x, packed_bf16))
    if float(jnp.max(jnp.abs(out_bf16 - ref))) > 0.25:
        raise AssertionError("Pallas bf16 output deviates too much from reference")

    print("KERNEL_OK")
</pallas_src>

<mosaic_0001>
module attributes {stable_mosaic.version = 11 : i64} {
  func.func @_bottleneck_b_kernel(%arg0: i32, %arg1: i32, %arg2: memref<2x20x16x128xf32, #tpu.memory_space<any>>, %arg3: memref<128x128xf32, #tpu.memory_space<vmem>>, %arg4: memref<1x128xf32, #tpu.memory_space<vmem>>, %arg5: memref<1152x128xf32, #tpu.memory_space<vmem>>, %arg6: memref<1x128xf32, #tpu.memory_space<vmem>>, %arg7: memref<128x128xf32, #tpu.memory_space<vmem>>, %arg8: memref<1x128xf32, #tpu.memory_space<vmem>>, %arg9: memref<128x128xf32, #tpu.memory_space<vmem>>, %arg10: memref<1x128xf32, #tpu.memory_space<vmem>>, %arg11: memref<1x64x128xf32, #tpu.memory_space<vmem>>, %arg12: memref<2x8x16x128xf32, #tpu.memory_space<vmem>>, %arg13: memref<2x!tpu.dma_semaphore, #tpu.memory_space<semaphore_mem>>, %arg14: memref<8x20x128xf32, #tpu.memory_space<vmem>>, %arg15: memref<64x1152xf32, #tpu.memory_space<vmem>>) attributes {dimension_semantics = [#tpu.dimension_semantics<parallel>, #tpu.dimension_semantics<arbitrary>], iteration_bounds = array<i64: 2, 4>, scalar_prefetch = 0 : i64, scratch_operands = 4 : i64, tpu.core_type = #tpu.core_type<tc>, window_params = [{}, {pipeline_mode = #tpu.pipeline_mode<synchronous>, transform_indices = @transform_1, window_bounds = array<i64: 128, 128>}, {pipeline_mode = #tpu.pipeline_mode<synchronous>, transform_indices = @transform_2, window_bounds = array<i64: 1, 128>}, {pipeline_mode = #tpu.pipeline_mode<synchronous>, transform_indices = @transform_3, window_bounds = array<i64: 1152, 128>}, {pipeline_mode = #tpu.pipeline_mode<synchronous>, transform_indices = @transform_4, window_bounds = array<i64: 1, 128>}, {pipeline_mode = #tpu.pipeline_mode<synchronous>, transform_indices = @transform_5, window_bounds = array<i64: 128, 128>}, {pipeline_mode = #tpu.pipeline_mode<synchronous>, transform_indices = @transform_6, window_bounds = array<i64: 1, 128>}, {pipeline_mode = #tpu.pipeline_mode<synchronous>, transform_indices = @transform_7, window_bounds = array<i64: 128, 128>}, {pipeline_mode = #tpu.pipeline_mode<synchronous>, transform_indices = @transform_8, window_bounds = array<i64: 1, 128>}, {transform_indices = @transform_9, window_bounds = array<i64: 1, 64, 128>}]} {
    %c2_i32 = arith.constant 2 : i32
    %c0_i32 = arith.constant 0 : i32
    %0 = arith.cmpi eq, %c2_i32, %c0_i32 : i32
    %c1_i32 = arith.constant 1 : i32
    %1 = arith.select %0, %c1_i32, %c2_i32 : i32
    %2 = arith.remsi %arg1, %1 : i32
    %c0_i32_0 = arith.constant 0 : i32
    %3 = arith.cmpi ne, %2, %c0_i32_0 : i32
    %c0_i32_1 = arith.constant 0 : i32
    %4 = arith.cmpi slt, %2, %c0_i32_1 : i32
    %c0_i32_2 = arith.constant 0 : i32
    %5 = arith.cmpi slt, %1, %c0_i32_2 : i32
    %6 = arith.xori %4, %5 : i1
    %7 = arith.andi %6, %3 : i1
    %8 = arith.addi %2, %1 : i32
    %9 = arith.select %7, %8, %2 : i32
    %c0_i32_3 = arith.constant 0 : i32
    %10 = arith.cmpi eq, %arg1, %c0_i32_3 : i32
    %11 = arith.extui %10 : i1 to i32
    %c0_i32_4 = arith.constant 0 : i32
    %12 = arith.cmpi ne, %11, %c0_i32_4 : i32
    scf.if %12 {
      %c0_i32_90 = arith.constant 0 : i32
      %c0_i32_91 = arith.constant 0 : i32
      %c0_i32_92 = arith.constant 0 : i32
      %c0_i32_93 = arith.constant 0 : i32
      %c0_i32_94 = arith.constant 0 : i32
      %99 = tpu.memref_slice %arg2[%arg0, %c0_i32_92, %c0_i32_93, %c0_i32_94] : memref<2x20x16x128xf32, #tpu.memory_space<any>> -> memref<1x8x16x128xf32, #tpu.memory_space<any>>
      %100 = tpu.memref_squeeze %99 : memref<1x8x16x128xf32, #tpu.memory_space<any>> -> memref<8x16x128xf32, #tpu.memory_space<any>>
      %c0_i32_95 = arith.constant 0 : i32
      %c0_i32_96 = arith.constant 0 : i32
      %c0_i32_97 = arith.constant 0 : i32
      %101 = tpu.memref_slice %arg12[%c0_i32_90, %c0_i32_95, %c0_i32_96, %c0_i32_97] : memref<2x8x16x128xf32, #tpu.memory_space<vmem>> -> memref<1x8x16x128xf32, #tpu.memory_space<vmem>>
      %102 = tpu.memref_squeeze %101 : memref<1x8x16x128xf32, #tpu.memory_space<vmem>> -> memref<8x16x128xf32, #tpu.memory_space<vmem>>
      %103 = tpu.memref_slice %arg13[%c0_i32_91] : memref<2x!tpu.dma_semaphore, #tpu.memory_space<semaphore_mem>> -> memref<1x!tpu.dma_semaphore, #tpu.memory_space<semaphore_mem>>
      %104 = tpu.memref_squeeze %103 : memref<1x!tpu.dma_semaphore, #tpu.memory_space<semaphore_mem>> -> memref<!tpu.dma_semaphore, #tpu.memory_space<semaphore_mem>>
      tpu.enqueue_dma source(%100 : memref<8x16x128xf32, #tpu.memory_space<any>>) target(%102 : memref<8x16x128xf32, #tpu.memory_space<vmem>>) target_semaphore(%104 : memref<!tpu.dma_semaphore, #tpu.memory_space<semaphore_mem>>)
    } else {
    }
    %c4_i32 = arith.constant 4 : i32
    %13 = arith.muli %arg1, %c4_i32 : i32
    %c0_i32_5 = arith.constant 0 : i32
    %c0_i32_6 = arith.constant 0 : i32
    %14 = tpu.memref_slice %arg2[%arg0, %13, %c0_i32_5, %c0_i32_6] : memref<2x20x16x128xf32, #tpu.memory_space<any>> -> memref<1x8x16x128xf32, #tpu.memory_space<any>>
    %15 = tpu.memref_squeeze %14 : memref<1x8x16x128xf32, #tpu.memory_space<any>> -> memref<8x16x128xf32, #tpu.memory_space<any>>
    %c0_i32_7 = arith.constant 0 : i32
    %c0_i32_8 = arith.constant 0 : i32
    %c0_i32_9 = arith.constant 0 : i32
    %16 = tpu.memref_slice %arg12[%9, %c0_i32_7, %c0_i32_8, %c0_i32_9] : memref<2x8x16x128xf32, #tpu.memory_space<vmem>> -> memref<1x8x16x128xf32, #tpu.memory_space<vmem>>
    %17 = tpu.memref_squeeze %16 : memref<1x8x16x128xf32, #tpu.memory_space<vmem>> -> memref<8x16x128xf32, #tpu.memory_space<vmem>>
    %18 = tpu.memref_slice %arg13[%9] : memref<2x!tpu.dma_semaphore, #tpu.memory_space<semaphore_mem>> -> memref<1x!tpu.dma_semaphore, #tpu.memory_space<semaphore_mem>>
    %19 = tpu.memref_squeeze %18 : memref<1x!tpu.dma_semaphore, #tpu.memory_space<semaphore_mem>> -> memref<!tpu.dma_semaphore, #tpu.memory_space<semaphore_mem>>
    tpu.wait_dma2 semaphore(%19 : memref<!tpu.dma_semaphore, #tpu.memory_space<semaphore_mem>>) src(%15 : memref<8x16x128xf32, #tpu.memory_space<any>>) dst(%17 : memref<8x16x128xf32, #tpu.memory_space<vmem>>)
    %c1_i32_10 = arith.constant 1 : i32
    %20 = arith.addi %arg1, %c1_i32_10 : i32
    %c4_i32_11 = arith.constant 4 : i32
    %21 = arith.cmpi slt, %20, %c4_i32_11 : i32
    %22 = arith.extui %21 : i1 to i32
    %c0_i32_12 = arith.constant 0 : i32
    %23 = arith.cmpi ne, %22, %c0_i32_12 : i32
    scf.if %23 {
      %c1_i32_90 = arith.constant 1 : i32
      %99 = arith.addi %arg1, %c1_i32_90 : i32
      %c1_i32_91 = arith.constant 1 : i32
      %100 = arith.subi %c1_i32_91, %9 : i32
      %c4_i32_92 = arith.constant 4 : i32
      %101 = arith.muli %99, %c4_i32_92 : i32
      %c0_i32_93 = arith.constant 0 : i32
      %c0_i32_94 = arith.constant 0 : i32
      %102 = tpu.memref_slice %arg2[%arg0, %101, %c0_i32_93, %c0_i32_94] : memref<2x20x16x128xf32, #tpu.memory_space<any>> -> memref<1x8x16x128xf32, #tpu.memory_space<any>>
      %103 = tpu.memref_squeeze %102 : memref<1x8x16x128xf32, #tpu.memory_space<any>> -> memref<8x16x128xf32, #tpu.memory_space<any>>
      %c0_i32_95 = arith.constant 0 : i32
      %c0_i32_96 = arith.constant 0 : i32
      %c0_i32_97 = arith.constant 0 : i32
      %104 = tpu.memref_slice %arg12[%100, %c0_i32_95, %c0_i32_96, %c0_i32_97] : memref<2x8x16x128xf32, #tpu.memory_space<vmem>> -> memref<1x8x16x128xf32, #tpu.memory_space<vmem>>
      %105 = tpu.memref_squeeze %104 : memref<1x8x16x128xf32, #tpu.memory_space<vmem>> -> memref<8x16x128xf32, #tpu.memory_space<vmem>>
      %106 = tpu.memref_slice %arg13[%100] : memref<2x!tpu.dma_semaphore, #tpu.memory_space<semaphore_mem>> -> memref<1x!tpu.dma_semaphore, #tpu.memory_space<semaphore_mem>>
      %107 = tpu.memref_squeeze %106 : memref<1x!tpu.dma_semaphore, #tpu.memory_space<semaphore_mem>> -> memref<!tpu.dma_semaphore, #tpu.memory_space<semaphore_mem>>
      tpu.enqueue_dma source(%103 : memref<8x16x128xf32, #tpu.memory_space<any>>) target(%105 : memref<8x16x128xf32, #tpu.memory_space<vmem>>) target_semaphore(%107 : memref<!tpu.dma_semaphore, #tpu.memory_space<semaphore_mem>>)
    } else {
    }
    %24 = arith.index_cast %9 : i32 to index
    %c0 = arith.constant 0 : index
    %c0_13 = arith.constant 0 : index
    %c0_14 = arith.constant 0 : index
    %25 = vector.load %arg12[%24, %c0, %c0_13, %c0_14] : memref<2x8x16x128xf32, #tpu.memory_space<vmem>>, vector<1x8x16x128xf32>
    %26 = vector.shape_cast %25 : vector<1x8x16x128xf32> to vector<8x16x128xf32>
    %27 = vector.shape_cast %26 : vector<8x16x128xf32> to vector<128x128xf32>
    %c0_15 = arith.constant 0 : index
    %c0_16 = arith.constant 0 : index
    %28 = vector.load %arg3[%c0_15, %c0_16] : memref<128x128xf32, #tpu.memory_space<vmem>>, vector<128x128xf32>
    %cst = arith.constant dense<0.000000e+00> : vector<128x128xf32>
    %29 = tpu.matmul %27, %28, %cst {dimension_numbers = #tpu.dot_dimension_numbers<[1], [0], [0], [1], [0, 0, 1, 1], [], []>} : vector<128x128xf32>, vector<128x128xf32>, vector<128x128xf32> -> vector<128x128xf32>
    %c0_17 = arith.constant 0 : index
    %c0_18 = arith.constant 0 : index
    %30 = vector.load %arg4[%c0_17, %c0_18] : memref<1x128xf32, #tpu.memory_space<vmem>>, vector<1x128xf32>
    %31 = vector.broadcast %30 : vector<1x128xf32> to vector<128x128xf32>
    %32 = arith.addf %29, %31 : vector<128x128xf32>
    %cst_19 = arith.constant 0.000000e+00 : f32
    %33 = vector.broadcast %cst_19 : f32 to vector<128x128xf32>
    %34 = arith.maximumf %32, %33 : vector<128x128xf32>
    %cst_20 = arith.constant 0.000000e+00 : f32
    %35 = vector.broadcast %cst_20 : f32 to vector<8x2x128xf32>
    %c0_21 = arith.constant 0 : index
    %c0_22 = arith.constant 0 : index
    %c0_23 = arith.constant 0 : index
    %36 = vector.load %arg14[%c0_21, %c0_22, %c0_23] : memref<8x20x128xf32, #tpu.memory_space<vmem>>, vector<8x2x128xf32>
    tpu.vector_store %arg14[%c0_21, %c0_22, %c0_23], %35 {strides = array<i32>} : memref<8x20x128xf32, #tpu.memory_space<vmem>>, vector<8x2x128xf32>,
    %c0_24 = arith.constant 0 : index
    %c18 = arith.constant 18 : index
    %c0_25 = arith.constant 0 : index
    %37 = vector.load %arg14[%c0_24, %c18, %c0_25] : memref<8x20x128xf32, #tpu.memory_space<vmem>>, vector<8x2x128xf32>
    tpu.vector_store %arg14[%c0_24, %c18, %c0_25], %35 {strides = array<i32>} : memref<8x20x128xf32, #tpu.memory_space<vmem>>, vector<8x2x128xf32>,
    %38 = vector.shape_cast %34 : vector<128x128xf32> to vector<8x16x128xf32>
    %c0_26 = arith.constant 0 : index
    %c2 = arith.constant 2 : index
    %c0_27 = arith.constant 0 : index
    %39 = vector.load %arg14[%c0_26, %c2, %c0_27] : memref<8x20x128xf32, #tpu.memory_space<vmem>>, vector<8x16x128xf32>
    tpu.vector_store %arg14[%c0_26, %c2, %c0_27], %38 {strides = array<i32>} : memref<8x20x128xf32, #tpu.memory_space<vmem>>, vector<8x16x128xf32>,
    %cst_28 = arith.constant 0.000000e+00 : f32
    %40 = vector.broadcast %cst_28 : f32 to vector<2x20x128xf32>
    %c0_i32_29 = arith.constant 0 : i32
    %41 = arith.cmpi eq, %arg1, %c0_i32_29 : i32
    %42 = arith.extui %41 : i1 to i32
    %c0_i32_30 = arith.constant 0 : i32
    %43 = arith.cmpi ne, %42, %c0_i32_30 : i32
    scf.if %43 {
      %c0_90 = arith.constant 0 : index
      %c0_91 = arith.constant 0 : index
      %c0_92 = arith.constant 0 : index
      %99 = vector.load %arg14[%c0_90, %c0_91, %c0_92] : memref<8x20x128xf32, #tpu.memory_space<vmem>>, vector<2x20x128xf32>
      tpu.vector_store %arg14[%c0_90, %c0_91, %c0_92], %40 {strides = array<i32>} : memref<8x20x128xf32, #tpu.memory_space<vmem>>, vector<2x20x128xf32>,
    } else {
    }
    %c3_i32 = arith.constant 3 : i32
    %44 = arith.cmpi eq, %arg1, %c3_i32 : i32
    %45 = arith.extui %44 : i1 to i32
    %c0_i32_31 = arith.constant 0 : i32
    %46 = arith.cmpi ne, %45, %c0_i32_31 : i32
    scf.if %46 {
      %c6 = arith.constant 6 : index
      %c0_90 = arith.constant 0 : index
      %c0_91 = arith.constant 0 : index
      %99 = vector.load %arg14[%c6, %c0_90, %c0_91] : memref<8x20x128xf32, #tpu.memory_space<vmem>>, vector<2x20x128xf32>
      tpu.vector_store %arg14[%c6, %c0_90, %c0_91], %40 {strides = array<i32>} : memref<8x20x128xf32, #tpu.memory_space<vmem>>, vector<2x20x128xf32>,
    } else {
    }
    %c0_32 = arith.constant 0 : index
    %c0_33 = arith.constant 0 : index
    %c0_34 = arith.constant 0 : index
    %47 = vector.load %arg14[%c0_32, %c0_33, %c0_34] : memref<8x20x128xf32, #tpu.memory_space<vmem>>, vector<4x16x128xf32>
    %48 = vector.shape_cast %47 : vector<4x16x128xf32> to vector<64x128xf32>
    %c0_35 = arith.constant 0 : index
    %c0_36 = arith.constant 0 : index
    %49 = vector.load %arg15[%c0_35, %c0_36] : memref<64x1152xf32, #tpu.memory_space<vmem>>, vector<64x128xf32>
    tpu.vector_store %arg15[%c0_35, %c0_36], %48 {strides = array<i32>} : memref<64x1152xf32, #tpu.memory_space<vmem>>, vector<64x128xf32>,
    %c0_37 = arith.constant 0 : index
    %c2_38 = arith.constant 2 : index
    %c0_39 = arith.constant 0 : index
    %50 = vector.load %arg14[%c0_37, %c2_38, %c0_39] : memref<8x20x128xf32, #tpu.memory_space<vmem>>, vector<4x16x128xf32>
    %51 = vector.shape_cast %50 : vector<4x16x128xf32> to vector<64x128xf32>
    %c0_40 = arith.constant 0 : index
    %c128 = arith.constant 128 : index
    %52 = vector.load %arg15[%c0_40, %c128] : memref<64x1152xf32, #tpu.memory_space<vmem>>, vector<64x128xf32>
    tpu.vector_store %arg15[%c0_40, %c128], %51 {strides = array<i32>} : memref<64x1152xf32, #tpu.memory_space<vmem>>, vector<64x128xf32>,
    %c0_41 = arith.constant 0 : index
    %c4 = arith.constant 4 : index
    %c0_42 = arith.constant 0 : index
    %53 = vector.load %arg14[%c0_41, %c4, %c0_42] : memref<8x20x128xf32, #tpu.memory_space<vmem>>, vector<4x16x128xf32>
    %54 = vector.shape_cast %53 : vector<4x16x128xf32> to vector<64x128xf32>
    %c0_43 = arith.constant 0 : index
    %c256 = arith.constant 256 : index
    %55 = vector.load %arg15[%c0_43, %c256] : memref<64x1152xf32, #tpu.memory_space<vmem>>, vector<64x128xf32>
    tpu.vector_store %arg15[%c0_43, %c256], %54 {strides = array<i32>} : memref<64x1152xf32, #tpu.memory_space<vmem>>, vector<64x128xf32>,
    %c2_44 = arith.constant 2 : index
    %c0_45 = arith.constant 0 : index
    %c0_46 = arith.constant 0 : index
    %56 = vector.load %arg14[%c2_44, %c0_45, %c0_46] : memref<8x20x128xf32, #tpu.memory_space<vmem>>, vector<4x16x128xf32>
    %57 = vector.shape_cast %56 : vector<4x16x128xf32> to vector<64x128xf32>
    %c0_47 = arith.constant 0 : index
    %c384 = arith.constant 384 : index
    %58 = vector.load %arg15[%c0_47, %c384] : memref<64x1152xf32, #tpu.memory_space<vmem>>, vector<64x128xf32>
    tpu.vector_store %arg15[%c0_47, %c384], %57 {strides = array<i32>} : memref<64x1152xf32, #tpu.memory_space<vmem>>, vector<64x128xf32>,
    %c2_48 = arith.constant 2 : index
    %c2_49 = arith.constant 2 : index
    %c0_50 = arith.constant 0 : index
    %59 = vector.load %arg14[%c2_48, %c2_49, %c0_50] : memref<8x20x128xf32, #tpu.memory_space<vmem>>, vector<4x16x128xf32>
    %60 = vector.shape_cast %59 : vector<4x16x128xf32> to vector<64x128xf32>
    %c0_51 = arith.constant 0 : index
    %c512 = arith.constant 512 : index
    %61 = vector.load %arg15[%c0_51, %c512] : memref<64x1152xf32, #tpu.memory_space<vmem>>, vector<64x128xf32>
    tpu.vector_store %arg15[%c0_51, %c512], %60 {strides = array<i32>} : memref<64x1152xf32, #tpu.memory_space<vmem>>, vector<64x128xf32>,
    %c2_52 = arith.constant 2 : index
    %c4_53 = arith.constant 4 : index
    %c0_54 = arith.constant 0 : index
    %62 = vector.load %arg14[%c2_52, %c4_53, %c0_54] : memref<8x20x128xf32, #tpu.memory_space<vmem>>, vector<4x16x128xf32>
    %63 = vector.shape_cast %62 : vector<4x16x128xf32> to vector<64x128xf32>
    %c0_55 = arith.constant 0 : index
    %c640 = arith.constant 640 : index
    %64 = vector.load %arg15[%c0_55, %c640] : memref<64x1152xf32, #tpu.memory_space<vmem>>, vector<64x128xf32>
    tpu.vector_store %arg15[%c0_55, %c640], %63 {strides = array<i32>} : memref<64x1152xf32, #tpu.memory_space<vmem>>, vector<64x128xf32>,
    %c4_56 = arith.constant 4 : index
    %c0_57 = arith.constant 0 : index
    %c0_58 = arith.constant 0 : index
    %65 = vector.load %arg14[%c4_56, %c0_57, %c0_58] : memref<8x20x128xf32, #tpu.memory_space<vmem>>, vector<4x16x128xf32>
    %66 = vector.shape_cast %65 : vector<4x16x128xf32> to vector<64x128xf32>
    %c0_59 = arith.constant 0 : index
    %c768 = arith.constant 768 : index
    %67 = vector.load %arg15[%c0_59, %c768] : memref<64x1152xf32, #tpu.memory_space<vmem>>, vector<64x128xf32>
    tpu.vector_store %arg15[%c0_59, %c768], %66 {strides = array<i32>} : memref<64x1152xf32, #tpu.memory_space<vmem>>, vector<64x128xf32>,
    %c4_60 = arith.constant 4 : index
    %c2_61 = arith.constant 2 : index
    %c0_62 = arith.constant 0 : index
    %68 = vector.load %arg14[%c4_60, %c2_61, %c0_62] : memref<8x20x128xf32, #tpu.memory_space<vmem>>, vector<4x16x128xf32>
    %69 = vector.shape_cast %68 : vector<4x16x128xf32> to vector<64x128xf32>
    %c0_63 = arith.constant 0 : index
    %c896 = arith.constant 896 : index
    %70 = vector.load %arg15[%c0_63, %c896] : memref<64x1152xf32, #tpu.memory_space<vmem>>, vector<64x128xf32>
    tpu.vector_store %arg15[%c0_63, %c896], %69 {strides = array<i32>} : memref<64x1152xf32, #tpu.memory_space<vmem>>, vector<64x128xf32>,
    %c4_64 = arith.constant 4 : index
    %c4_65 = arith.constant 4 : index
    %c0_66 = arith.constant 0 : index
    %71 = vector.load %arg14[%c4_64, %c4_65, %c0_66] : memref<8x20x128xf32, #tpu.memory_space<vmem>>, vector<4x16x128xf32>
    %72 = vector.shape_cast %71 : vector<4x16x128xf32> to vector<64x128xf32>
    %c0_67 = arith.constant 0 : index
    %c1024 = arith.constant 1024 : index
    %73 = vector.load %arg15[%c0_67, %c1024] : memref<64x1152xf32, #tpu.memory_space<vmem>>, vector<64x128xf32>
    tpu.vector_store %arg15[%c0_67, %c1024], %72 {strides = array<i32>} : memref<64x1152xf32, #tpu.memory_space<vmem>>, vector<64x128xf32>,
    %c0_68 = arith.constant 0 : index
    %c0_69 = arith.constant 0 : index
    %74 = vector.load %arg15[%c0_68, %c0_69] : memref<64x1152xf32, #tpu.memory_space<vmem>>, vector<64x1152xf32>
    %c0_70 = arith.constant 0 : index
    %c0_71 = arith.constant 0 : index
    %75 = vector.load %arg5[%c0_70, %c0_71] : memref<1152x128xf32, #tpu.memory_space<vmem>>, vector<1152x128xf32>
    %cst_72 = arith.constant dense<0.000000e+00> : vector<64x128xf32>
    %76 = tpu.matmul %74, %75, %cst_72 {dimension_numbers = #tpu.dot_dimension_numbers<[1], [0], [0], [1], [0, 0, 1, 1], [], []>} : vector<64x1152xf32>, vector<1152x128xf32>, vector<64x128xf32> -> vector<64x128xf32>
    %c0_73 = arith.constant 0 : index
    %c0_74 = arith.constant 0 : index
    %77 = vector.load %arg6[%c0_73, %c0_74] : memref<1x128xf32, #tpu.memory_space<vmem>>, vector<1x128xf32>
    %78 = vector.broadcast %77 : vector<1x128xf32> to vector<64x128xf32>
    %79 = arith.addf %76, %78 : vector<64x128xf32>
    %cst_75 = arith.constant 0.000000e+00 : f32
    %80 = vector.broadcast %cst_75 : f32 to vector<64x128xf32>
    %81 = arith.maximumf %79, %80 : vector<64x128xf32>
    %c0_76 = arith.constant 0 : index
    %c0_77 = arith.constant 0 : index
    %82 = vector.load %arg7[%c0_76, %c0_77] : memref<128x128xf32, #tpu.memory_space<vmem>>, vector<128x128xf32>
    %cst_78 = arith.constant dense<0.000000e+00> : vector<64x128xf32>
    %83 = tpu.matmul %81, %82, %cst_78 {dimension_numbers = #tpu.dot_dimension_numbers<[1], [0], [0], [1], [0, 0, 1, 1], [], []>} : vector<64x128xf32>, vector<128x128xf32>, vector<64x128xf32> -> vector<64x128xf32>
    %c0_79 = arith.constant 0 : index
    %c0_80 = arith.constant 0 : index
    %84 = vector.load %arg8[%c0_79, %c0_80] : memref<1x128xf32, #tpu.memory_space<vmem>>, vector<1x128xf32>
    %85 = vector.broadcast %84 : vector<1x128xf32> to vector<64x128xf32>
    %86 = arith.addf %83, %85 : vector<64x128xf32>
    %87 = vector.extract_strided_slice %27 {offsets = [32, 0], sizes = [64, 128], strides = [1, 1]} : vector<128x128xf32> to vector<64x128xf32>
    %c0_81 = arith.constant 0 : index
    %c0_82 = arith.constant 0 : index
    %88 = vector.load %arg9[%c0_81, %c0_82] : memref<128x128xf32, #tpu.memory_space<vmem>>, vector<128x128xf32>
    %cst_83 = arith.constant dense<0.000000e+00> : vector<64x128xf32>
    %89 = tpu.matmul %87, %88, %cst_83 {dimension_numbers = #tpu.dot_dimension_numbers<[1], [0], [0], [1], [0, 0, 1, 1], [], []>} : vector<64x128xf32>, vector<128x128xf32>, vector<64x128xf32> -> vector<64x128xf32>
    %c0_84 = arith.constant 0 : index
    %c0_85 = arith.constant 0 : index
    %90 = vector.load %arg10[%c0_84, %c0_85] : memref<1x128xf32, #tpu.memory_space<vmem>>, vector<1x128xf32>
    %91 = vector.broadcast %90 : vector<1x128xf32> to vector<64x128xf32>
    %92 = arith.addf %89, %91 : vector<64x128xf32>
    %93 = arith.addf %86, %92 : vector<64x128xf32>
    %cst_86 = arith.constant 0.000000e+00 : f32
    %94 = vector.broadcast %cst_86 : f32 to vector<64x128xf32>
    %95 = arith.maximumf %93, %94 : vector<64x128xf32>
    %c0_87 = arith.constant 0 : index
    %c0_88 = arith.constant 0 : index
    %c0_89 = arith.constant 0 : index
    %96 = vector.load %arg11[%c0_87, %c0_88, %c0_89] : memref<1x64x128xf32, #tpu.memory_space<vmem>>, vector<1x64x128xf32>
    %97 = vector.shape_cast %96 : vector<1x64x128xf32> to vector<64x128xf32>
    %98 = vector.shape_cast %95 : vector<64x128xf32> to vector<1x64x128xf32>
    tpu.vector_store %arg11[%c0_87, %c0_88, %c0_89], %98 {strides = array<i32>} : memref<1x64x128xf32, #tpu.memory_space<vmem>>, vector<1x64x128xf32>,
    return
  }
  func.func @transform_1(%arg0: i32, %arg1: i32) -> (i32, i32) {
    %c0_i32 = arith.constant 0 : i32
    %c0_i32_0 = arith.constant 0 : i32
    %c0_i32_1 = arith.constant 0 : i32
    return %c0_i32, %c0_i32_0 : i32, i32
  }
  func.func @transform_2(%arg0: i32, %arg1: i32) -> (i32, i32) {
    %c0_i32 = arith.constant 0 : i32
    %c0_i32_0 = arith.constant 0 : i32
    %c0_i32_1 = arith.constant 0 : i32
    return %c0_i32, %c0_i32_0 : i32, i32
  }
  func.func @transform_3(%arg0: i32, %arg1: i32) -> (i32, i32) {
    %c0_i32 = arith.constant 0 : i32
    %c0_i32_0 = arith.constant 0 : i32
    %c0_i32_1 = arith.constant 0 : i32
    return %c0_i32, %c0_i32_0 : i32, i32
  }
  func.func @transform_4(%arg0: i32, %arg1: i32) -> (i32, i32) {
    %c0_i32 = arith.constant 0 : i32
    %c0_i32_0 = arith.constant 0 : i32
    %c0_i32_1 = arith.constant 0 : i32
    return %c0_i32, %c0_i32_0 : i32, i32
  }
  func.func @transform_5(%arg0: i32, %arg1: i32) -> (i32, i32) {
    %c0_i32 = arith.constant 0 : i32
    %c0_i32_0 = arith.constant 0 : i32
    %c0_i32_1 = arith.constant 0 : i32
    return %c0_i32, %c0_i32_0 : i32, i32
  }
  func.func @transform_6(%arg0: i32, %arg1: i32) -> (i32, i32) {
    %c0_i32 = arith.constant 0 : i32
    %c0_i32_0 = arith.constant 0 : i32
    %c0_i32_1 = arith.constant 0 : i32
    return %c0_i32, %c0_i32_0 : i32, i32
  }
  func.func @transform_7(%arg0: i32, %arg1: i32) -> (i32, i32) {
    %c0_i32 = arith.constant 0 : i32
    %c0_i32_0 = arith.constant 0 : i32
    %c0_i32_1 = arith.constant 0 : i32
    return %c0_i32, %c0_i32_0 : i32, i32
  }
  func.func @transform_8(%arg0: i32, %arg1: i32) -> (i32, i32) {
    %c0_i32 = arith.constant 0 : i32
    %c0_i32_0 = arith.constant 0 : i32
    %c0_i32_1 = arith.constant 0 : i32
    return %c0_i32, %c0_i32_0 : i32, i32
  }
  func.func @transform_9(%arg0: i32, %arg1: i32) -> (i32, i32, i32) {
    %c0_i32 = arith.constant 0 : i32
    %c0_i32_0 = arith.constant 0 : i32
    return %arg0, %arg1, %c0_i32 : i32, i32, i32
  }
}

</mosaic_0001>

<llo_original>
// kernel: bottleneck_b_pallas.1
$region0: #{bottleneck_b_pallas.1}
  #allocation0 [shape = 'u32[]', space=smem, size = 0x4, offset = 0x4, fixed_abs, tag = 'smem constant byte address 0x4 - core index']
  #allocation1 [shape = 'u32[144,128]{1,0:T(1,128)}', space=vmem, size = 0x12000, scoped, tag = 'internal scratch']
  #allocation2 [shape = 'f32[2,8,16,128]{3,2,1,0:T(8,128)}', space=vmem, size = 0x20000, scoped, tag = 'scratch operand']
  #allocation3 [shape = 's32[2]{0}', space=sflag, size = 0x8, scoped, tag = 'scratch operand']
  #allocation4 [shape = 'f32[8,20,128]{2,1,0:T(8,128)}', space=vmem, size = 0x18000, scoped, tag = 'scratch operand']
  #allocation5 [shape = 'f32[64,1152]{1,0:T(8,128)}', space=vmem, size = 0x48000, scoped, tag = 'scratch operand']
  #allocation8 [shape = 's32[]', space=sflag, size = 0x4, offset = 0, fixed_abs, tag = 'sflag constant byte address 0x0 - dummy sync flag']
  #allocation9 [shape = 's32[]', space=sflag, size = 0x4, offset = 0, fixed_abs, tag = 'sflag constant byte address 0x0 - dummy sync flag']
  %s0 = inlined_call_operand.vmem [shape: f32[2,20,16,128], index: 0, kind: input, shape index: {}]
  %s1 = inlined_call_operand.vmem [shape: f32[128,128], index: 1, kind: input, shape index: {}]
  %s2 = inlined_call_operand.vmem [shape: f32[1,128], index: 2, kind: input, shape index: {}]
  %s3 = inlined_call_operand.vmem [shape: f32[1152,128], index: 3, kind: input, shape index: {}]
  %s4 = inlined_call_operand.vmem [shape: f32[1,128], index: 4, kind: input, shape index: {}]
  %s5 = inlined_call_operand.vmem [shape: f32[128,128], index: 5, kind: input, shape index: {}]
  %s6 = inlined_call_operand.vmem [shape: f32[1,128], index: 6, kind: input, shape index: {}]
  %s7 = inlined_call_operand.vmem [shape: f32[128,128], index: 7, kind: input, shape index: {}]
  %s8 = inlined_call_operand.vmem [shape: f32[1,128], index: 8, kind: input, shape index: {}]
  %s9 = inlined_call_operand.hbm [shape: f32[2,256,128], index: 9, kind: output, shape index: {}]
  %s10 = sld [smem:[#allocation0]]
  $region149: #{bottleneck_b_pallas.1} parent=0
    _
  %s12 = ssub.s32 1, %s10
  %s13 = scalar_select 0, %s12, %s10
  $region1: #{bottleneck_b_pallas.1} parent=0
    #allocation6 [shape = 'u8[65536]{0}', space=vmem, size = 0x10000, scoped, tag = 'output window, operand 0']
    #allocation7 [shape = 's32[2]{0}', space=sflag, size = 0x8, scoped, tag = 'scoped memory for bottleneck_b_pallas.1']
    %14 = vsyncpa [#allocation7], 0
    %s15 = scalar_lea.sflag [#allocation7], 1
    %16 = vsyncpa %s15, 0
    loop: start=0, step=1, limit=10
    $region2: #{bottleneck_b_pallas.1} parent=1 // loop_pre_header
      _
    $region3: #{bottleneck_b_pallas.1} parent=1 // loop_header
      %s18 = sphi 0, %s22
      %p19 = scmp.ge.s32.totalorder %s18, 10
      %s25 = sphi 0, %s37
      %s26 = sphi 0, %s33
      %s27 = sphi 0, %s25
      %s28 = sphi 0, %s26
      %s29 = sphi 0, %s27
      %s30 = sphi 0, %s28
      %s38 = sphi 0, %s38
      %s40 = sphi 0, %s38
      %s41 = sphi 0, %s40
      %s55 = sphi 0, %s41
      %s59 = sphi 0, %s59
      %s61 = sphi 0, %s59
      %s62 = sphi 0, %s61
      %s76 = sphi 0, %s62
      %s80 = sphi 0, %s80
      %s82 = sphi 0, %s80
      %s83 = sphi 0, %s82
      %s97 = sphi 0, %s83
      %s101 = sphi 0, %s101
      %s103 = sphi 0, %s101
      %s104 = sphi 0, %s103
      %s118 = sphi 0, %s104
      %s122 = sphi 0, %s122
      %s124 = sphi 0, %s122
      %s125 = sphi 0, %s124
      %s139 = sphi 0, %s125
      %s143 = sphi 0, %s143
      %s145 = sphi 0, %s143
      %s146 = sphi 0, %s145
      %s160 = sphi 0, %s146
      %s164 = sphi 0, %s164
      %s166 = sphi 0, %s164
      %s167 = sphi 0, %s166
      %s181 = sphi 0, %s167
      %s185 = sphi 0, %s185
      %s187 = sphi 0, %s185
      %s188 = sphi 0, %s187
      %s202 = sphi 0, %s188
      %s210 = sphi 0, %s212
      %s213 = sphi 0, %s210
      %s214 = sphi 0, %s213
      %s230 = sphi 0, %s214
    $region4: #{bottleneck_b_pallas.1} parent=1 // loop_header_branch
      %21 = sbr.rel (%p19) target = $region8
    $region5: #{bottleneck_b_pallas.1} parent=1 // loop_body
      %s23 = ssub.s32 %s18, 1
      %s24 = ssub.s32 %s18, 2
      %s31 = sadd.s32 1, %s26
      %p32 = scmp.ge.s32.totalorder %s31, 4
      %s33 = scalar_select %p32, 0, %s31
      %s34 = sadd.s32 1, %s25
      %s35 = scalar_select %p32, %s34, %s25
      %p36 = scmp.ge.s32.totalorder %s35, 2
      %s37 = scalar_select %p36, 0, %s35
      %s39 = sadd.s32 %s38, 1
      %p42 = scmp.eq.s32.totalorder %s18, 7
      %p43 = scmp.ne.s32.totalorder %s38, %s40
      %p44 = scmp.eq.s32.totalorder %s18, 0
      %p45 = por %p43, %p44
      %p46 = scmp.ne.s32.totalorder %s38, %s40
      %p47 = scmp.eq.s32.totalorder %s23, 7
      %p48 = por %p46, %p47
      %p49 = scmp.ne.s32.totalorder %s40, %s41
      %p50 = scmp.eq.s32.totalorder %s23, 0
      %p51 = por %p49, %p50
      %p52 = scmp.ne.s32.totalorder %s40, %s41
      %p53 = scmp.eq.s32.totalorder %s24, 7
      %p54 = por %p52, %p53
      %p56 = scmp.ne.s32.totalorder %s41, %s55
      %p57 = scmp.eq.s32.totalorder %s24, 0
      %p58 = por %p56, %p57
      %s60 = sadd.s32 %s59, 1
      %p63 = scmp.eq.s32.totalorder %s18, 7
      %p64 = scmp.ne.s32.totalorder %s59, %s61
      %p65 = scmp.eq.s32.totalorder %s18, 0
      %p66 = por %p64, %p65
      %p67 = scmp.ne.s32.totalorder %s59, %s61
      %p68 = scmp.eq.s32.totalorder %s23, 7
      %p69 = por %p67, %p68
      %p70 = scmp.ne.s32.totalorder %s61, %s62
      %p71 = scmp.eq.s32.totalorder %s23, 0
      %p72 = por %p70, %p71
      %p73 = scmp.ne.s32.totalorder %s61, %s62
      %p74 = scmp.eq.s32.totalorder %s24, 7
      %p75 = por %p73, %p74
      %p77 = scmp.ne.s32.totalorder %s62, %s76
      %p78 = scmp.eq.s32.totalorder %s24, 0
      %p79 = por %p77, %p78
      %s81 = sadd.s32 %s80, 1
      %p84 = scmp.eq.s32.totalorder %s18, 7
      %p85 = scmp.ne.s32.totalorder %s80, %s82
      %p86 = scmp.eq.s32.totalorder %s18, 0
      %p87 = por %p85, %p86
      %p88 = scmp.ne.s32.totalorder %s80, %s82
      %p89 = scmp.eq.s32.totalorder %s23, 7
      %p90 = por %p88, %p89
      %p91 = scmp.ne.s32.totalorder %s82, %s83
      %p92 = scmp.eq.s32.totalorder %s23, 0
      %p93 = por %p91, %p92
      %p94 = scmp.ne.s32.totalorder %s82, %s83
      %p95 = scmp.eq.s32.totalorder %s24, 7
      %p96 = por %p94, %p95
      %p98 = scmp.ne.s32.totalorder %s83, %s97
      %p99 = scmp.eq.s32.totalorder %s24, 0
      %p100 = por %p98, %p99
      %s102 = sadd.s32 %s101, 1
      %p105 = scmp.eq.s32.totalorder %s18, 7
      %p106 = scmp.ne.s32.totalorder %s101, %s103
      %p107 = scmp.eq.s32.totalorder %s18, 0
      %p108 = por %p106, %p107
      %p109 = scmp.ne.s32.totalorder %s101, %s103
      %p110 = scmp.eq.s32.totalorder %s23, 7
      %p111 = por %p109, %p110
      %p112 = scmp.ne.s32.totalorder %s103, %s104
      %p113 = scmp.eq.s32.totalorder %s23, 0
      %p114 = por %p112, %p113
      %p115 = scmp.ne.s32.totalorder %s103, %s104
      %p116 = scmp.eq.s32.totalorder %s24, 7
      %p117 = por %p115, %p116
      %p119 = scmp.ne.s32.totalorder %s104, %s118
      %p120 = scmp.eq.s32.totalorder %s24, 0
      %p121 = por %p119, %p120
      %s123 = sadd.s32 %s122, 1
      %p126 = scmp.eq.s32.totalorder %s18, 7
      %p127 = scmp.ne.s32.totalorder %s122, %s124
      %p128 = scmp.eq.s32.totalorder %s18, 0
      %p129 = por %p127, %p128
      %p130 = scmp.ne.s32.totalorder %s122, %s124
      %p131 = scmp.eq.s32.totalorder %s23, 7
      %p132 = por %p130, %p131
      %p133 = scmp.ne.s32.totalorder %s124, %s125
      %p134 = scmp.eq.s32.totalorder %s23, 0
      %p135 = por %p133, %p134
      %p136 = scmp.ne.s32.totalorder %s124, %s125
      %p137 = scmp.eq.s32.totalorder %s24, 7
      %p138 = por %p136, %p137
      %p140 = scmp.ne.s32.totalorder %s125, %s139
      %p141 = scmp.eq.s32.totalorder %s24, 0
      %p142 = por %p140, %p141
      %s144 = sadd.s32 %s143, 1
      %p147 = scmp.eq.s32.totalorder %s18, 7
      %p148 = scmp.ne.s32.totalorder %s143, %s145
      %p149 = scmp.eq.s32.totalorder %s18, 0
      %p150 = por %p148, %p149
      %p151 = scmp.ne.s32.totalorder %s143, %s145
      %p152 = scmp.eq.s32.totalorder %s23, 7
      %p153 = por %p151, %p152
      %p154 = scmp.ne.s32.totalorder %s145, %s146
      %p155 = scmp.eq.s32.totalorder %s23, 0
      %p156 = por %p154, %p155
      %p157 = scmp.ne.s32.totalorder %s145, %s146
      %p158 = scmp.eq.s32.totalorder %s24, 7
      %p159 = por %p157, %p158
      %p161 = scmp.ne.s32.totalorder %s146, %s160
      %p162 = scmp.eq.s32.totalorder %s24, 0
      %p163 = por %p161, %p162
      %s165 = sadd.s32 %s164, 1
      %p168 = scmp.eq.s32.totalorder %s18, 7
      %p169 = scmp.ne.s32.totalorder %s164, %s166
      %p170 = scmp.eq.s32.totalorder %s18, 0
      %p171 = por %p169, %p170
      %p172 = scmp.ne.s32.totalorder %s164, %s166
      %p173 = scmp.eq.s32.totalorder %s23, 7
      %p174 = por %p172, %p173
      %p175 = scmp.ne.s32.totalorder %s166, %s167
      %p176 = scmp.eq.s32.totalorder %s23, 0
      %p177 = por %p175, %p176
      %p178 = scmp.ne.s32.totalorder %s166, %s167
      %p179 = scmp.eq.s32.totalorder %s24, 7
      %p180 = por %p178, %p179
      %p182 = scmp.ne.s32.totalorder %s167, %s181
      %p183 = scmp.eq.s32.totalorder %s24, 0
      %p184 = por %p182, %p183
      %s186 = sadd.s32 %s185, 1
      %p189 = scmp.eq.s32.totalorder %s18, 7
      %p190 = scmp.ne.s32.totalorder %s185, %s187
      %p191 = scmp.eq.s32.totalorder %s18, 0
      %p192 = por %p190, %p191
      %p193 = scmp.ne.s32.totalorder %s185, %s187
      %p194 = scmp.eq.s32.totalorder %s23, 7
      %p195 = por %p193, %p194
      %p196 = scmp.ne.s32.totalorder %s187, %s188
      %p197 = scmp.eq.s32.totalorder %s23, 0
      %p198 = por %p196, %p197
      %p199 = scmp.ne.s32.totalorder %s187, %s188
      %p200 = scmp.eq.s32.totalorder %s24, 7
      %p201 = por %p199, %p200
      %p203 = scmp.ne.s32.totalorder %s188, %s202
      %p204 = scmp.eq.s32.totalorder %s24, 0
      %p205 = por %p203, %p204
      %s206 = ssub.s32 %s25, %s37
      %s207 = ssub.s32 %s26, %s33
      %s208 = sor.u32 %s206, %s207
      %p209 = scmp.eq.s32.totalorder %s208, 0
      %s211 = sadd.s32 %s210, 1
      %s212 = scalar_select %p209, %s210, %s211
      %p215 = pneg %p209
      %p216 = scmp.eq.s32.totalorder %s18, 7
      %p217 = por %p215, %p216
      %p218 = scmp.ne.s32.totalorder %s210, %s213
      %p219 = scmp.eq.s32.totalorder %s18, 0
      %p220 = por %p218, %p219
      %p221 = scmp.ne.s32.totalorder %s210, %s213
      %p222 = scmp.eq.s32.totalorder %s23, 7
      %p223 = por %p221, %p222
      %p224 = scmp.ne.s32.totalorder %s213, %s214
      %p225 = scmp.eq.s32.totalorder %s23, 0
      %p226 = por %p224, %p225
      %p227 = scmp.ne.s32.totalorder %s213, %s214
      %p228 = scmp.eq.s32.totalorder %s24, 7
      %p229 = por %p227, %p228
      %p231 = scmp.ne.s32.totalorder %s214, %s230
      %p232 = scmp.eq.s32.totalorder %s24, 0
      %p233 = por %p231, %p232
      %p234 = scmp.le.s32.totalorder 1, %s18
      %p235 = scmp.lt.s32.totalorder %s18, 9
      %p236 = pnand %p234, %p235
      %p237 = pneg %p236
      // Predicated region
      $region9: #{bottleneck_b_pallas.1} parent=5 // pred_check
        _
      $region10: #{bottleneck_b_pallas.1} parent=5 // pred_check_branch
        %239 = sbr.rel (%p236) target = $region12
      $region11: #{bottleneck_b_pallas.1} parent=5 // pred_region
        %s240 = ssub.s32 %s18, 1
        // Predicated region
        $region13: #{bottleneck_b_pallas.1} parent=11 // pred_check
          %p241 = pneg %p51
        $region14: #{bottleneck_b_pallas.1} parent=11 // pred_check_branch
          %243 = sbr.rel (%p241) target = $region16
        $region15: #{bottleneck_b_pallas.1} parent=11 // pred_region
          _
        $region16: #{bottleneck_b_pallas.1} parent=11 // pred_fallthru
          _
        // Predicated region
        $region17: #{bottleneck_b_pallas.1} parent=11 // pred_check
          %p244 = pneg %p72
        $region18: #{bottleneck_b_pallas.1} parent=11 // pred_check_branch
          %246 = sbr.rel (%p244) target = $region20
        $region19: #{bottleneck_b_pallas.1} parent=11 // pred_region
          _
        $region20: #{bottleneck_b_pallas.1} parent=11 // pred_fallthru
          _
        // Predicated region
        $region21: #{bottleneck_b_pallas.1} parent=11 // pred_check
          %p247 = pneg %p93
        $region22: #{bottleneck_b_pallas.1} parent=11 // pred_check_branch
          %249 = sbr.rel (%p247) target = $region24
        $region23: #{bottleneck_b_pallas.1} parent=11 // pred_region
          _
        $region24: #{bottleneck_b_pallas.1} parent=11 // pred_fallthru
          _
        // Predicated region
        $region25: #{bottleneck_b_pallas.1} parent=11 // pred_check
          %p250 = pneg %p114
        $region26: #{bottleneck_b_pallas.1} parent=11 // pred_check_branch
          %252 = sbr.rel (%p250) target = $region28
        $region27: #{bottleneck_b_pallas.1} parent=11 // pred_region
          _
        $region28: #{bottleneck_b_pallas.1} parent=11 // pred_fallthru
          _
        // Predicated region
        $region29: #{bottleneck_b_pallas.1} parent=11 // pred_check
          %p253 = pneg %p135
        $region30: #{bottleneck_b_pallas.1} parent=11 // pred_check_branch
          %255 = sbr.rel (%p253) target = $region32
        $region31: #{bottleneck_b_pallas.1} parent=11 // pred_region
          _
        $region32: #{bottleneck_b_pallas.1} parent=11 // pred_fallthru
          _
        // Predicated region
        $region33: #{bottleneck_b_pallas.1} parent=11 // pred_check
          %p256 = pneg %p156
        $region34: #{bottleneck_b_pallas.1} parent=11 // pred_check_branch
          %258 = sbr.rel (%p256) target = $region36
        $region35: #{bottleneck_b_pallas.1} parent=11 // pred_region
          _
        $region36: #{bottleneck_b_pallas.1} parent=11 // pred_fallthru
          _
        // Predicated region
        $region37: #{bottleneck_b_pallas.1} parent=11 // pred_check
          %p259 = pneg %p177
        $region38: #{bottleneck_b_pallas.1} parent=11 // pred_check_branch
          %261 = sbr.rel (%p259) target = $region40
        $region39: #{bottleneck_b_pallas.1} parent=11 // pred_region
          _
        $region40: #{bottleneck_b_pallas.1} parent=11 // pred_fallthru
          _
        // Predicated region
        $region41: #{bottleneck_b_pallas.1} parent=11 // pred_check
          %p262 = pneg %p198
        $region42: #{bottleneck_b_pallas.1} parent=11 // pred_check_branch
          %264 = sbr.rel (%p262) target = $region44
        $region43: #{bottleneck_b_pallas.1} parent=11 // pred_region
          _
        $region44: #{bottleneck_b_pallas.1} parent=11 // pred_fallthru
          _
      $region12: #{bottleneck_b_pallas.1} parent=5 // pred_fallthru
        _
      %p265 = scmp.lt.s32.totalorder %s18, 8
      // Predicated region
      $region45: #{bottleneck_b_pallas.1} parent=5 // pred_check
        %p266 = pneg %p265
      $region46: #{bottleneck_b_pallas.1} parent=5 // pred_check_branch
        %268 = sbr.rel (%p266) target = $region48
      $region47: #{bottleneck_b_pallas.1} parent=5 // pred_region
        _
      $region48: #{bottleneck_b_pallas.1} parent=5 // pred_fallthru
        _
      %p269 = scmp.le.s32.totalorder 1, %s18
      %p270 = scmp.lt.s32.totalorder %s18, 9
      %p271 = pnand %p269, %p270
      %p272 = pneg %p271
      // Predicated region
      $region49: #{bottleneck_b_pallas.1} parent=5 // pred_check
        _
      $region50: #{bottleneck_b_pallas.1} parent=5 // pred_check_branch
        %274 = sbr.rel (%p271) target = $region52
      $region51: #{bottleneck_b_pallas.1} parent=5 // pred_region
        %s275 = ssub.s32 %s18, 1
        %p276 = pneg %p51
        %p277 = pneg %p48
        %p278 = pneg %p72
        %p279 = pneg %p69
        %p280 = pneg %p93
        %p281 = pneg %p90
        %p282 = pneg %p114
        %p283 = pneg %p111
        %p284 = pneg %p135
        %p285 = pneg %p132
        %p286 = pneg %p156
        %p287 = pneg %p153
        %p288 = pneg %p177
        %p289 = pneg %p174
        %p290 = pneg %p198
        %p291 = pneg %p195
        %p292 = pneg %p226
        %p293 = pneg %p223
        %s294 = sand.u32 %s213, 1
        %s295 = scalar_lea.sflag [#allocation7], %s294
        %s296 = sand.u32 %s213, 1
        %s297 = smul.addr %s296, 64
        %s298 = scalar_lea.vmem [#allocation6], %s297
        %s299 = smul.u32 8, %s28
        %p300 = scmp.lt.s32.totalorder %s28, 0
        %s301 = ssub.s32 0, %s28
        %s302 = scalar_select %p300, %s301, %s28
        %s303 = sand.u32 %s302, 1
        %s304 = ssub.s32 0, %s303
        %s305 = scalar_select %p300, %s304, %s303
        %p306 = scmp.ne.s32.totalorder %s305, 0
        %p307 = scmp.lt.s32.totalorder %s305, 0
        %p308 = pnand %p307, %p306
        %p309 = pneg %p308
        %s310 = sadd.s32 %s305, 2
        %s311 = scalar_select %p309, %s310, %s305
        %p312 = scmp.eq.s32.totalorder %s28, 0
        // Predicated region
        $region53: #{bottleneck_b_pallas.1} parent=51 // pred_check
          %p313 = pneg %p312
        $region54: #{bottleneck_b_pallas.1} parent=51 // pred_check_branch
          %315 = sbr.rel (%p313) target = $region56
        $region55: #{bottleneck_b_pallas.1} parent=51 // pred_region
          %s316 = smul.u32 %s27, 320
          %s317 = scalar_lea.vmem %s0, %s316
          %p319 = scmp.lt.u32.totalorder 128, 8
          %p320 = pneg %p319
          // Predicated region
          $region57: #{bottleneck_b_pallas.1} parent=55 // pred_check
            _
          $region58: #{bottleneck_b_pallas.1} parent=55 // pred_check_branch
            %322 = sbr.rel (%p319) target = $region60
          $region59: #{bottleneck_b_pallas.1} parent=55 // pred_region
            %s337 = sand.u32 128, 7
            %p338 = scmp.eq.s32.totalorder %s337, 0
            // Predicated region
            $region72: #{bottleneck_b_pallas.1} parent=59 // pred_check
              %p339 = pneg %p338
            $region73: #{bottleneck_b_pallas.1} parent=59 // pred_check_branch
              %341 = sbr.rel (%p339) target = $region75
            $region74: #{bottleneck_b_pallas.1} parent=59 // pred_region
              loop: start=0, step=1, limit=1
              $region76: #{bottleneck_b_pallas.1} parent=74 // loop_pre_header
                _
              $region77: #{bottleneck_b_pallas.1} parent=74 // loop_header
                %s343 = sphi 0, %s347
                %p344 = scmp.ge.s32.totalorder %s343, 1
                %s348 = sphi %s317, %s317
                %s349 = sphi [#allocation2], [#allocation2]
              $region78: #{bottleneck_b_pallas.1} parent=74 // loop_header_branch
                %346 = sbr.rel (%p344) target = $region82
              $region79: #{bottleneck_b_pallas.1} parent=74 // loop_body
                %v350 = vld [vmem:[%s348] sm:$0xff]
                %351 = vst [vmem:[%s349] sm:$0xff] %v350
                %v352 = vld [vmem:[%s348 + $0x8] sm:$0xff]
                %353 = vst [vmem:[%s349 + $0x8] sm:$0xff] %v352
                %v354 = vld [vmem:[%s348 + $0x10] sm:$0xff]
                %355 = vst [vmem:[%s349 + $0x10] sm:$0xff] %v354
                %v356 = vld [vmem:[%s348 + $0x18] sm:$0xff]
                %357 = vst [vmem:[%s349 + $0x18] sm:$0xff] %v356
                %v358 = vld [vmem:[%s348 + $0x20] sm:$0xff]
                %359 = vst [vmem:[%s349 + $0x20] sm:$0xff] %v358
                %v360 = vld [vmem:[%s348 + $0x28] sm:$0xff]
                %361 = vst [vmem:[%s349 + $0x28] sm:$0xff] %v360
                %v362 = vld [vmem:[%s348 + $0x30] sm:$0xff]
                %363 = vst [vmem:[%s349 + $0x30] sm:$0xff] %v362
                %v364 = vld [vmem:[%s348 + $0x38] sm:$0xff]
                %365 = vst [vmem:[%s349 + $0x38] sm:$0xff] %v364
                %v366 = vld [vmem:[%s348 + $0x40] sm:$0xff]
                %367 = vst [vmem:[%s349 + $0x40] sm:$0xff] %v366
                %v368 = vld [vmem:[%s348 + $0x48] sm:$0xff]
                %369 = vst [vmem:[%s349 + $0x48] sm:$0xff] %v368
                %v370 = vld [vmem:[%s348 + $0x50] sm:$0xff]
                %371 = vst [vmem:[%s349 + $0x50] sm:$0xff] %v370
                %v372 = vld [vmem:[%s348 + $0x58] sm:$0xff]
                %373 = vst [vmem:[%s349 + $0x58] sm:$0xff] %v372
                %v374 = vld [vmem:[%s348 + $0x60] sm:$0xff]
                %375 = vst [vmem:[%s349 + $0x60] sm:$0xff] %v374
                %v376 = vld [vmem:[%s348 + $0x68] sm:$0xff]
                %377 = vst [vmem:[%s349 + $0x68] sm:$0xff] %v376
                %v378 = vld [vmem:[%s348 + $0x70] sm:$0xff]
                %379 = vst [vmem:[%s349 + $0x70] sm:$0xff] %v378
                %v380 = vld [vmem:[%s348 + $0x78] sm:$0xff]
                %381 = vst [vmem:[%s349 + $0x78] sm:$0xff] %v380
              $region80: #{bottleneck_b_pallas.1} parent=74 // loop_footer
                %s347 = sadd.s32 1, %s343
              $region81: #{bottleneck_b_pallas.1} parent=74 // loop_footer_branch
                %342 = sbr.rel target = $region77
              $region82: #{bottleneck_b_pallas.1} parent=74 // loop_exit
                _
            $region75: #{bottleneck_b_pallas.1} parent=59 // pred_fallthru
              _
            %p382 = pneg %p338
            // Predicated region
            $region83: #{bottleneck_b_pallas.1} parent=59 // pred_check
              _
            $region84: #{bottleneck_b_pallas.1} parent=59 // pred_check_branch
              %384 = sbr.rel (%p338) target = $region86
            $region85: #{bottleneck_b_pallas.1} parent=59 // pred_region
              %s385 = sand.u32 128, 7
            $region86: #{bottleneck_b_pallas.1} parent=59 // pred_fallthru
              _
          $region60: #{bottleneck_b_pallas.1} parent=55 // pred_fallthru
            _
          // Predicated region
          $region61: #{bottleneck_b_pallas.1} parent=55 // pred_check
            %p323 = pneg %p319
          $region62: #{bottleneck_b_pallas.1} parent=55 // pred_check_branch
            %325 = sbr.rel (%p323) target = $region64
          $region63: #{bottleneck_b_pallas.1} parent=55 // pred_region
            %s326 = sshllo.u32 0, 128
            loop: start=0, step=1, limit=1
            $region65: #{bottleneck_b_pallas.1} parent=63 // loop_pre_header
              _
            $region66: #{bottleneck_b_pallas.1} parent=63 // loop_header
              %s328 = sphi 0, %s332
              %p329 = scmp.ge.s32.totalorder %s328, 1
              %s333 = sphi %s317, %s317
              %s334 = sphi [#allocation2], [#allocation2]
            $region67: #{bottleneck_b_pallas.1} parent=63 // loop_header_branch
              %331 = sbr.rel (%p329) target = $region71
            $region68: #{bottleneck_b_pallas.1} parent=63 // loop_body
              %v335 = vld [vmem:[%s333] sm:%s326]
              %336 = vst [vmem:[%s334] sm:%s326] %v335
            $region69: #{bottleneck_b_pallas.1} parent=63 // loop_footer
              %s332 = sadd.s32 1, %s328
            $region70: #{bottleneck_b_pallas.1} parent=63 // loop_footer_branch
              %327 = sbr.rel target = $region66
            $region71: #{bottleneck_b_pallas.1} parent=63 // loop_exit
              _
          $region64: #{bottleneck_b_pallas.1} parent=55 // pred_fallthru
            _
          // Predicated region
          $region87: #{bottleneck_b_pallas.1} parent=55 // pred_check
            _
          $region88: #{bottleneck_b_pallas.1} parent=55 // pred_check_branch
            %388 = sbr.rel (0) target = $region90
          $region89: #{bottleneck_b_pallas.1} parent=55 // pred_region
            %389 = vsyncadd [#allocation3], 2048
          $region90: #{bottleneck_b_pallas.1} parent=55 // pred_fallthru
            _
        $region56: #{bottleneck_b_pallas.1} parent=51 // pred_fallthru
          _
        %s390 = smul.u32 %s311, 128
        %s391 = scalar_lea.vmem [#allocation2], %s390
        %s392 = scalar_lea.sflag [#allocation3], %s311
        %s393 = smul.u32 8, 16
        %s394 = smul.u32 %s393, 1
        %s395 = sshll.u32 %s394, 4
        %396 = dma.done %s392, %s395
        %s397 = sadd.s32 %s28, 1
        %p398 = scmp.lt.s32.totalorder %s397, 4
        // Predicated region
        $region91: #{bottleneck_b_pallas.1} parent=51 // pred_check
          %p399 = pneg %p398
        $region92: #{bottleneck_b_pallas.1} parent=51 // pred_check_branch
          %401 = sbr.rel (%p399) target = $region94
        $region93: #{bottleneck_b_pallas.1} parent=51 // pred_region
          %s402 = ssub.s32 1, %s311
          %s403 = smul.u32 %s397, 4
          %s404 = smul.u32 %s403, 16
          %s405 = smul.u32 %s27, 320
          %s406 = sadd.s32 %s404, %s405
          %s407 = scalar_lea.vmem %s0, %s406
          %s408 = smul.u32 %s402, 128
          %s409 = scalar_lea.vmem [#allocation2], %s408
          %s410 = scalar_lea.sflag [#allocation3], %s402
          %p412 = scmp.lt.u32.totalorder 128, 8
          %p413 = pneg %p412
          // Predicated region
          $region95: #{bottleneck_b_pallas.1} parent=93 // pred_check
            _
          $region96: #{bottleneck_b_pallas.1} parent=93 // pred_check_branch
            %415 = sbr.rel (%p412) target = $region98
          $region97: #{bottleneck_b_pallas.1} parent=93 // pred_region
            %s430 = sand.u32 128, 7
            %p431 = scmp.eq.s32.totalorder %s430, 0
            // Predicated region
            $region110: #{bottleneck_b_pallas.1} parent=97 // pred_check
              %p432 = pneg %p431
            $region111: #{bottleneck_b_pallas.1} parent=97 // pred_check_branch
              %434 = sbr.rel (%p432) target = $region113
            $region112: #{bottleneck_b_pallas.1} parent=97 // pred_region
              loop: start=0, step=1, limit=1
              $region114: #{bottleneck_b_pallas.1} parent=112 // loop_pre_header
                _
              $region115: #{bottleneck_b_pallas.1} parent=112 // loop_header
                %s436 = sphi 0, %s440
                %p437 = scmp.ge.s32.totalorder %s436, 1
                %s441 = sphi %s407, %s407
                %s442 = sphi %s409, %s409
              $region116: #{bottleneck_b_pallas.1} parent=112 // loop_header_branch
                %439 = sbr.rel (%p437) target = $region120
              $region117: #{bottleneck_b_pallas.1} parent=112 // loop_body
                %v443 = vld [vmem:[%s441] sm:$0xff]
                %444 = vst [vmem:[%s442] sm:$0xff] %v443
                %v445 = vld [vmem:[%s441 + $0x8] sm:$0xff]
                %446 = vst [vmem:[%s442 + $0x8] sm:$0xff] %v445
                %v447 = vld [vmem:[%s441 + $0x10] sm:$0xff]
                %448 = vst [vmem:[%s442 + $0x10] sm:$0xff] %v447
                %v449 = vld [vmem:[%s441 + $0x18] sm:$0xff]
                %450 = vst [vmem:[%s442 + $0x18] sm:$0xff] %v449
                %v451 = vld [vmem:[%s441 + $0x20] sm:$0xff]
                %452 = vst [vmem:[%s442 + $0x20] sm:$0xff] %v451
                %v453 = vld [vmem:[%s441 + $0x28] sm:$0xff]
                %454 = vst [vmem:[%s442 + $0x28] sm:$0xff] %v453
                %v455 = vld [vmem:[%s441 + $0x30] sm:$0xff]
                %456 = vst [vmem:[%s442 + $0x30] sm:$0xff] %v455
                %v457 = vld [vmem:[%s441 + $0x38] sm:$0xff]
                %458 = vst [vmem:[%s442 + $0x38] sm:$0xff] %v457
                %v459 = vld [vmem:[%s441 + $0x40] sm:$0xff]
                %460 = vst [vmem:[%s442 + $0x40] sm:$0xff] %v459
                %v461 = vld [vmem:[%s441 + $0x48] sm:$0xff]
                %462 = vst [vmem:[%s442 + $0x48] sm:$0xff] %v461
                %v463 = vld [vmem:[%s441 + $0x50] sm:$0xff]
                %464 = vst [vmem:[%s442 + $0x50] sm:$0xff] %v463
                %v465 = vld [vmem:[%s441 + $0x58] sm:$0xff]
                %466 = vst [vmem:[%s442 + $0x58] sm:$0xff] %v465
                %v467 = vld [vmem:[%s441 + $0x60] sm:$0xff]
                %468 = vst [vmem:[%s442 + $0x60] sm:$0xff] %v467
                %v469 = vld [vmem:[%s441 + $0x68] sm:$0xff]
                %470 = vst [vmem:[%s442 + $0x68] sm:$0xff] %v469
                %v471 = vld [vmem:[%s441 + $0x70] sm:$0xff]
                %472 = vst [vmem:[%s442 + $0x70] sm:$0xff] %v471
                %v473 = vld [vmem:[%s441 + $0x78] sm:$0xff]
                %474 = vst [vmem:[%s442 + $0x78] sm:$0xff] %v473
              $region118: #{bottleneck_b_pallas.1} parent=112 // loop_footer
                %s440 = sadd.s32 1, %s436
              $region119: #{bottleneck_b_pallas.1} parent=112 // loop_footer_branch
                %435 = sbr.rel target = $region115
              $region120: #{bottleneck_b_pallas.1} parent=112 // loop_exit
                _
            $region113: #{bottleneck_b_pallas.1} parent=97 // pred_fallthru
              _
            %p475 = pneg %p431
            // Predicated region
            $region121: #{bottleneck_b_pallas.1} parent=97 // pred_check
              _
            $region122: #{bottleneck_b_pallas.1} parent=97 // pred_check_branch
              %477 = sbr.rel (%p431) target = $region124
            $region123: #{bottleneck_b_pallas.1} parent=97 // pred_region
              %s478 = sand.u32 128, 7
            $region124: #{bottleneck_b_pallas.1} parent=97 // pred_fallthru
              _
          $region98: #{bottleneck_b_pallas.1} parent=93 // pred_fallthru
            _
          // Predicated region
          $region99: #{bottleneck_b_pallas.1} parent=93 // pred_check
            %p416 = pneg %p412
          $region100: #{bottleneck_b_pallas.1} parent=93 // pred_check_branch
            %418 = sbr.rel (%p416) target = $region102
          $region101: #{bottleneck_b_pallas.1} parent=93 // pred_region
            %s419 = sshllo.u32 0, 128
            loop: start=0, step=1, limit=1
            $region103: #{bottleneck_b_pallas.1} parent=101 // loop_pre_header
              _
            $region104: #{bottleneck_b_pallas.1} parent=101 // loop_header
              %s421 = sphi 0, %s425
              %p422 = scmp.ge.s32.totalorder %s421, 1
              %s426 = sphi %s407, %s407
              %s427 = sphi %s409, %s409
            $region105: #{bottleneck_b_pallas.1} parent=101 // loop_header_branch
              %424 = sbr.rel (%p422) target = $region109
            $region106: #{bottleneck_b_pallas.1} parent=101 // loop_body
              %v428 = vld [vmem:[%s426] sm:%s419]
              %429 = vst [vmem:[%s427] sm:%s419] %v428
            $region107: #{bottleneck_b_pallas.1} parent=101 // loop_footer
              %s425 = sadd.s32 1, %s421
            $region108: #{bottleneck_b_pallas.1} parent=101 // loop_footer_branch
              %420 = sbr.rel target = $region104
            $region109: #{bottleneck_b_pallas.1} parent=101 // loop_exit
              _
          $region102: #{bottleneck_b_pallas.1} parent=93 // pred_fallthru
            _
          // Predicated region
          $region125: #{bottleneck_b_pallas.1} parent=93 // pred_check
            _
          $region126: #{bottleneck_b_pallas.1} parent=93 // pred_check_branch
            %481 = sbr.rel (0) target = $region128
          $region127: #{bottleneck_b_pallas.1} parent=93 // pred_region
            %482 = vsyncadd %s410, 2048
          $region128: #{bottleneck_b_pallas.1} parent=93 // pred_fallthru
            _
        $region94: #{bottleneck_b_pallas.1} parent=51 // pred_fallthru
          _
        %v483 = vld [vmem:[%s391] sm:$0xff]
        %v484 = vld [vmem:[%s391 + $0x8] sm:$0xff]
        %v485 = vld [vmem:[%s391 + $0x10] sm:$0xff]
        %v486 = vld [vmem:[%s391 + $0x18] sm:$0xff]
        %v487 = vld [vmem:[%s391 + $0x20] sm:$0xff]
        %v488 = vld [vmem:[%s391 + $0x28] sm:$0xff]
        %v489 = vld [vmem:[%s391 + $0x30] sm:$0xff]
        %v490 = vld [vmem:[%s391 + $0x38] sm:$0xff]
        %v491 = vld [vmem:[%s391 + $0x40] sm:$0xff]
        %v492 = vld [vmem:[%s391 + $0x48] sm:$0xff]
        %v493 = vld [vmem:[%s391 + $0x50] sm:$0xff]
        %v494 = vld [vmem:[%s391 + $0x58] sm:$0xff]
        %v495 = vld [vmem:[%s391 + $0x60] sm:$0xff]
        %v496 = vld [vmem:[%s391 + $0x68] sm:$0xff]
        %v497 = vld [vmem:[%s391 + $0x70] sm:$0xff]
        %v498 = vld [vmem:[%s391 + $0x78] sm:$0xff]
        %v499 = vld [vmem:[%s1] sm:$0xff]
        %v500 = vld [vmem:[%s1 + $0x8] sm:$0xff]
        %v501 = vld [vmem:[%s1 + $0x10] sm:$0xff]
        %v502 = vld [vmem:[%s1 + $0x18] sm:$0xff]
        %v503 = vld [vmem:[%s1 + $0x20] sm:$0xff]
        %v504 = vld [vmem:[%s1 + $0x28] sm:$0xff]
        %v505 = vld [vmem:[%s1 + $0x30] sm:$0xff]
        %v506 = vld [vmem:[%s1 + $0x38] sm:$0xff]
        %v507 = vld [vmem:[%s1 + $0x40] sm:$0xff]
        %v508 = vld [vmem:[%s1 + $0x48] sm:$0xff]
        %v509 = vld [vmem:[%s1 + $0x50] sm:$0xff]
        %v510 = vld [vmem:[%s1 + $0x58] sm:$0xff]
        %v511 = vld [vmem:[%s1 + $0x60] sm:$0xff]
        %v512 = vld [vmem:[%s1 + $0x68] sm:$0xff]
        %v513 = vld [vmem:[%s1 + $0x70] sm:$0xff]
        %v514 = vld [vmem:[%s1 + $0x78] sm:$0xff]
        %v515 = vld [vmem:[%s2] sm:$0x1]
        %v517 = vlaneseq
        %v518 = vshrl.u32 %v517, 7
        %v519 = vsub.s32 0, %v518
        %v520 = vrot.slane %v515, %v519
        %522 = vmatprep.subr.mxu0 0.0
        %523 = vmatpush1.msra.mxu0 %v499
        %524 = vmatprep.subr.mxu0 0.0
        %525 = vmatpush1.msra.mxu0 %v500
        %526 = vmatprep.subr.mxu0 0.0
        %527 = vmatpush1.msra.mxu0 %v501
        %528 = vmatprep.subr.mxu0 0.0
        %529 = vmatpush1.msra.mxu0 %v502
        %530 = vmatprep.subr.mxu0 0.0
        %531 = vmatpush1.msra.mxu0 %v503
        %532 = vmatprep.subr.mxu0 0.0
        %533 = vmatpush1.msra.mxu0 %v504
        %534 = vmatprep.subr.mxu0 0.0
        %535 = vmatpush1.msra.mxu0 %v505
        %536 = vmatprep.subr.mxu0 0.0
        %537 = vmatpush1.msra.mxu0 %v506
        %538 = vmatprep.subr.mxu0 0.0
        %539 = vmatpush1.msra.mxu0 %v507
        %540 = vmatprep.subr.mxu0 0.0
        %541 = vmatpush1.msra.mxu0 %v508
        %542 = vmatprep.subr.mxu0 0.0
        %543 = vmatpush1.msra.mxu0 %v509
        %544 = vmatprep.subr.mxu0 0.0
        %545 = vmatpush1.msra.mxu0 %v510
        %546 = vmatprep.subr.mxu0 0.0
        %547 = vmatpush1.msra.mxu0 %v511
        %548 = vmatprep.subr.mxu0 0.0
        %549 = vmatpush1.msra.mxu0 %v512
        %550 = vmatprep.subr.mxu0 0.0
        %551 = vmatpush1.msra.mxu0 %v513
        %552 = vmatprep.subr.mxu0 0.0
        %553 = vmatpush1.msra.mxu0 %v514
        %554 = vmatprep.subr.mxu0 0.0
        %555 = vmatpush1.msra.mxu0 0.0
        %556 = vmatprep.subr.mxu0 0.0
        %557 = vmatpush1.msra.mxu0 0.0
        %558 = vmatprep.subr.mxu0 0.0
        %559 = vmatpush1.msra.mxu0 0.0
        %560 = vmatprep.subr.mxu0 0.0
        %561 = vmatpush1.msra.mxu0 0.0
        %562 = vmatprep.subr.mxu0 0.0
        %563 = vmatpush1.msra.mxu0 0.0
        %564 = vmatprep.subr.mxu0 0.0
        %565 = vmatpush1.msra.mxu0 0.0
        %566 = vmatprep.subr.mxu0 0.0
        %567 = vmatpush1.msra.mxu0 0.0
        %568 = vmatprep.subr.mxu0 0.0
        %569 = vmatpush1.msra.mxu0 0.0
        %570 = vmatprep.subr.mxu0 0.0
        %571 = vmatpush1.msra.mxu0 0.0
        %572 = vmatprep.subr.mxu0 0.0
        %573 = vmatpush1.msra.mxu0 0.0
        %574 = vmatprep.subr.mxu0 0.0
        %575 = vmatpush1.msra.mxu0 0.0
        %576 = vmatprep.subr.mxu0 0.0
        %577 = vmatpush1.msra.mxu0 0.0
        %578 = vmatprep.subr.mxu0 0.0
        %579 = vmatpush1.msra.mxu0 0.0
        %580 = vmatprep.subr.mxu0 0.0
        %581 = vmatpush1.msra.mxu0 0.0
        %582 = vmatprep.subr.mxu0 0.0
        %583 = vmatpush1.msra.mxu0 0.0
        %584 = vmatprep.subr.mxu0 0.0
        %585 = vmatpush1.msra.mxu0 0.0
        %586 = vmatprep.mubr.f32.mxu0 0.0
        %587 = vmatmul.mubr.f32.gmra.mrb[0].mxu0 %v483
        %v588 = vpop.f32.mrb[0].mxu0
        %v589 = vadd.f32 %v520, %v588
        %v590 = vpop.f32.mrb[0].mxu0
        %591 = vmatprep.mubr.f32.mxu0 0.0
        %592 = vmatmul.mubr.f32.gmra.mrb[0].mxu0 %v484
        %v593 = vpop.f32.mrb[0].mxu0
        %v594 = vadd.f32 %v520, %v593
        %v595 = vpop.f32.mrb[0].mxu0
        %596 = vmatprep.mubr.f32.mxu0 0.0
        %597 = vmatmul.mubr.f32.gmra.mrb[0].mxu0 %v485
        %v598 = vpop.f32.mrb[0].mxu0
        %v599 = vadd.f32 %v520, %v598
        %v600 = vpop.f32.mrb[0].mxu0
        %601 = vmatprep.mubr.f32.mxu0 0.0
        %602 = vmatmul.mubr.f32.gmra.mrb[0].mxu0 %v486
        %v603 = vpop.f32.mrb[0].mxu0
        %v604 = vadd.f32 %v520, %v603
        %v605 = vpop.f32.mrb[0].mxu0
        %606 = vmatprep.mubr.f32.mxu0 0.0
        %607 = vmatmul.mubr.f32.gmra.mrb[0].mxu0 %v487
        %v608 = vpop.f32.mrb[0].mxu0
        %v609 = vadd.f32 %v520, %v608
        %v610 = vpop.f32.mrb[0].mxu0
        %611 = vmatprep.mubr.f32.mxu0 0.0
        %612 = vmatmul.mubr.f32.gmra.mrb[0].mxu0 %v488
        %v613 = vpop.f32.mrb[0].mxu0
        %v614 = vadd.f32 %v520, %v613
        %v615 = vpop.f32.mrb[0].mxu0
        %616 = vmatprep.mubr.f32.mxu0 0.0
        %617 = vmatmul.mubr.f32.gmra.mrb[0].mxu0 %v489
        %v618 = vpop.f32.mrb[0].mxu0
        %v619 = vadd.f32 %v520, %v618
        %v620 = vpop.f32.mrb[0].mxu0
        %621 = vmatprep.mubr.f32.mxu0 0.0
        %622 = vmatmul.mubr.f32.gmra.mrb[0].mxu0 %v490
        %v623 = vpop.f32.mrb[0].mxu0
        %v624 = vadd.f32 %v520, %v623
        %v625 = vpop.f32.mrb[0].mxu0
        %626 = vmatprep.mubr.f32.mxu0 0.0
        %627 = vmatmul.mubr.f32.gmra.mrb[0].mxu0 %v491
        %v628 = vpop.f32.mrb[0].mxu0
        %v629 = vadd.f32 %v520, %v628
        %v630 = vpop.f32.mrb[0].mxu0
        %631 = vmatprep.mubr.f32.mxu0 0.0
        %632 = vmatmul.mubr.f32.gmra.mrb[0].mxu0 %v492
        %v633 = vpop.f32.mrb[0].mxu0
        %v634 = vadd.f32 %v520, %v633
        %v635 = vpop.f32.mrb[0].mxu0
        %636 = vmatprep.mubr.f32.mxu0 0.0
        %637 = vmatmul.mubr.f32.gmra.mrb[0].mxu0 %v493
        %v638 = vpop.f32.mrb[0].mxu0
        %v639 = vadd.f32 %v520, %v638
        %v640 = vpop.f32.mrb[0].mxu0
        %641 = vmatprep.mubr.f32.mxu0 0.0
        %642 = vmatmul.mubr.f32.gmra.mrb[0].mxu0 %v494
        %v643 = vpop.f32.mrb[0].mxu0
        %v644 = vadd.f32 %v520, %v643
        %v645 = vpop.f32.mrb[0].mxu0
        %646 = vmatprep.mubr.f32.mxu0 0.0
        %647 = vmatmul.mubr.f32.gmra.mrb[0].mxu0 %v495
        %v648 = vpop.f32.mrb[0].mxu0
        %v649 = vadd.f32 %v520, %v648
        %v650 = vpop.f32.mrb[0].mxu0
        %651 = vmatprep.mubr.f32.mxu0 0.0
        %652 = vmatmul.mubr.f32.gmra.mrb[0].mxu0 %v496
        %v653 = vpop.f32.mrb[0].mxu0
        %v654 = vadd.f32 %v520, %v653
        %v655 = vpop.f32.mrb[0].mxu0
        %656 = vmatprep.mubr.f32.mxu0 0.0
        %657 = vmatmul.mubr.f32.gmra.mrb[0].mxu0 %v497
        %v658 = vpop.f32.mrb[0].mxu0
        %v659 = vadd.f32 %v520, %v658
        %v660 = vpop.f32.mrb[0].mxu0
        %661 = vmatprep.mubr.f32.mxu0 0.0
        %662 = vmatmul.mubr.f32.gmra.mrb[0].mxu0 %v498
        %v663 = vpop.f32.mrb[0].mxu0
        %v664 = vadd.f32 %v520, %v663
        %v665 = vpop.f32.mrb[0].mxu0
        %666 = vdwg.mxu0
        %v667 = vmax.f32 %v589, 0.0
        %v668 = vmax.f32 %v594, 0.0
        %v669 = vmax.f32 %v599, 0.0
        %v670 = vmax.f32 %v604, 0.0
        %v671 = vmax.f32 %v609, 0.0
        %v672 = vmax.f32 %v614, 0.0
        %v673 = vmax.f32 %v619, 0.0
        %v674 = vmax.f32 %v624, 0.0
        %v675 = vmax.f32 %v629, 0.0
        %v676 = vmax.f32 %v634, 0.0
        %v677 = vmax.f32 %v639, 0.0
        %v678 = vmax.f32 %v644, 0.0
        %v679 = vmax.f32 %v649, 0.0
        %v680 = vmax.f32 %v654, 0.0
        %v681 = vmax.f32 %v659, 0.0
        %v682 = vmax.f32 %v664, 0.0
        %683 = vst [vmem:[#allocation4] sm:$0x3] 0.0
        %684 = vst [vmem:[#allocation4 + $0x18] sm:$0x3] 0.0
        %685 = vst [vmem:[#allocation4 + $0x30] sm:$0x3] 0.0
        %686 = vst [vmem:[#allocation4 + $0x48] sm:$0x3] 0.0
        %687 = vst [vmem:[#allocation4 + $0x60] sm:$0x3] 0.0
        %688 = vst [vmem:[#allocation4 + $0x78] sm:$0x3] 0.0
        %689 = vst [vmem:[#allocation4 + $0x90] sm:$0x3] 0.0
        %690 = vst [vmem:[#allocation4 + $0xa8] sm:$0x3] 0.0
        %691 = vst [vmem:[#allocation4 + $0x12] sm:$0x3] 0.0
        %692 = vst [vmem:[#allocation4 + $0x2a] sm:$0x3] 0.0
        %693 = vst [vmem:[#allocation4 + $0x42] sm:$0x3] 0.0
        %694 = vst [vmem:[#allocation4 + $0x5a] sm:$0x3] 0.0
        %695 = vst [vmem:[#allocation4 + $0x72] sm:$0x3] 0.0
        %696 = vst [vmem:[#allocation4 + $0x8a] sm:$0x3] 0.0
        %697 = vst [vmem:[#allocation4 + $0xa2] sm:$0x3] 0.0
        %698 = vst [vmem:[#allocation4 + $0xba] sm:$0x3] 0.0
        %699 = vst [vmem:[#allocation4 + $0x2] sm:$0xff] %v667
        %700 = vst [vmem:[#allocation4 + $0xa] sm:$0xff] %v668
        %701 = vst [vmem:[#allocation4 + $0x1a] sm:$0xff] %v669
        %702 = vst [vmem:[#allocation4 + $0x22] sm:$0xff] %v670
        %703 = vst [vmem:[#allocation4 + $0x32] sm:$0xff] %v671
        %704 = vst [vmem:[#allocation4 + $0x3a] sm:$0xff] %v672
        %705 = vst [vmem:[#allocation4 + $0x4a] sm:$0xff] %v673
        %706 = vst [vmem:[#allocation4 + $0x52] sm:$0xff] %v674
        %707 = vst [vmem:[#allocation4 + $0x62] sm:$0xff] %v675
        %708 = vst [vmem:[#allocation4 + $0x6a] sm:$0xff] %v676
        %709 = vst [vmem:[#allocation4 + $0x7a] sm:$0xff] %v677
        %710 = vst [vmem:[#allocation4 + $0x82] sm:$0xff] %v678
        %711 = vst [vmem:[#allocation4 + $0x92] sm:$0xff] %v679
        %712 = vst [vmem:[#allocation4 + $0x9a] sm:$0xff] %v680
        %713 = vst [vmem:[#allocation4 + $0xaa] sm:$0xff] %v681
        %714 = vst [vmem:[#allocation4 + $0xb2] sm:$0xff] %v682
        // Predicated region
        $region129: #{bottleneck_b_pallas.1} parent=51 // pred_check
          %p715 = pneg %p312
        $region130: #{bottleneck_b_pallas.1} parent=51 // pred_check_branch
          %717 = sbr.rel (%p715) target = $region132
        $region131: #{bottleneck_b_pallas.1} parent=51 // pred_region
          %718 = vst [vmem:[#allocation4] sm:$0xff] 0.0
          %719 = vst [vmem:[#allocation4 + $0x8] sm:$0xff] 0.0
          %720 = vst [vmem:[#allocation4 + $0x10] sm:$0xf] 0.0
          %721 = vst [vmem:[#allocation4 + $0x18] sm:$0xff] 0.0
          %722 = vst [vmem:[#allocation4 + $0x20] sm:$0xff] 0.0
          %723 = vst [vmem:[#allocation4 + $0x28] sm:$0xf] 0.0
        $region132: #{bottleneck_b_pallas.1} parent=51 // pred_fallthru
          _
        %p724 = scmp.eq.s32.totalorder %s28, 3
        // Predicated region
        $region133: #{bottleneck_b_pallas.1} parent=51 // pred_check
          %p725 = pneg %p724
        $region134: #{bottleneck_b_pallas.1} parent=51 // pred_check_branch
          %727 = sbr.rel (%p725) target = $region136
        $region135: #{bottleneck_b_pallas.1} parent=51 // pred_region
          %s728 = scalar_lea.vmem [#allocation4], 144
          %729 = vst [vmem:[%s728] sm:$0xff] 0.0
          %730 = vst [vmem:[%s728 + $0x8] sm:$0xff] 0.0
          %731 = vst [vmem:[%s728 + $0x10] sm:$0xf] 0.0
          %732 = vst [vmem:[%s728 + $0x18] sm:$0xff] 0.0
          %733 = vst [vmem:[%s728 + $0x20] sm:$0xff] 0.0
          %734 = vst [vmem:[%s728 + $0x28] sm:$0xf] 0.0
        $region136: #{bottleneck_b_pallas.1} parent=51 // pred_fallthru
          _
        %v735 = vld [vmem:[#allocation4] sm:$0xff]
        %v736 = vld [vmem:[#allocation4 + $0x8] sm:$0xff]
        %v737 = vld [vmem:[#allocation4 + $0x18] sm:$0xff]
        %v738 = vld [vmem:[#allocation4 + $0x20] sm:$0xff]
        %v739 = vld [vmem:[#allocation4 + $0x30] sm:$0xff]
        %v740 = vld [vmem:[#allocation4 + $0x38] sm:$0xff]
        %v741 = vld [vmem:[#allocation4 + $0x48] sm:$0xff]
        %v742 = vld [vmem:[#allocation4 + $0x50] sm:$0xff]
        %743 = vst [vmem:[#allocation5] sm:$0xff] %v735
        %744 = vst [vmem:[#allocation5 + $0x48] sm:$0xff] %v736
        %745 = vst [vmem:[#allocation5 + $0x90] sm:$0xff] %v737
        %746 = vst [vmem:[#allocation5 + $0xd8] sm:$0xff] %v738
        %747 = vst [vmem:[#allocation5 + $0x120] sm:$0xff] %v739
        %748 = vst [vmem:[#allocation5 + $0x168] sm:$0xff] %v740
        %749 = vst [vmem:[#allocation5 + $0x1b0] sm:$0xff] %v741
        %750 = vst [vmem:[#allocation5 + $0x1f8] sm:$0xff] %v742
        %v751 = vld [vmem:[#allocation4 + $0x2] sm:$0xff]
        %v752 = vld [vmem:[#allocation4 + $0xa] sm:$0xff]
        %v753 = vld [vmem:[#allocation4 + $0x1a] sm:$0xff]
        %v754 = vld [vmem:[#allocation4 + $0x22] sm:$0xff]
        %v755 = vld [vmem:[#allocation4 + $0x32] sm:$0xff]
        %v756 = vld [vmem:[#allocation4 + $0x3a] sm:$0xff]
        %v757 = vld [vmem:[#allocation4 + $0x4a] sm:$0xff]
        %v758 = vld [vmem:[#allocation4 + $0x52] sm:$0xff]
        %759 = vst [vmem:[#allocation5 + $0x8] sm:$0xff] %v751
        %760 = vst [vmem:[#allocation5 + $0x50] sm:$0xff] %v752
        %761 = vst [vmem:[#allocation5 + $0x98] sm:$0xff] %v753
        %762 = vst [vmem:[#allocation5 + $0xe0] sm:$0xff] %v754
        %763 = vst [vmem:[#allocation5 + $0x128] sm:$0xff] %v755
        %764 = vst [vmem:[#allocation5 + $0x170] sm:$0xff] %v756
        %765 = vst [vmem:[#allocation5 + $0x1b8] sm:$0xff] %v757
        %766 = vst [vmem:[#allocation5 + $0x200] sm:$0xff] %v758
        %v767 = vld [vmem:[#allocation4 + $0x4] sm:$0xff]
        %v768 = vld [vmem:[#allocation4 + $0xc] sm:$0xff]
        %v769 = vld [vmem:[#allocation4 + $0x1c] sm:$0xff]
        %v770 = vld [vmem:[#allocation4 + $0x24] sm:$0xff]
        %v771 = vld [vmem:[#allocation4 + $0x34] sm:$0xff]
        %v772 = vld [vmem:[#allocation4 + $0x3c] sm:$0xff]
        %v773 = vld [vmem:[#allocation4 + $0x4c] sm:$0xff]
        %v774 = vld [vmem:[#allocation4 + $0x54] sm:$0xff]
        %775 = vst [vmem:[#allocation5 + $0x10] sm:$0xff] %v767
        %776 = vst [vmem:[#allocation5 + $0x58] sm:$0xff] %v768
        %777 = vst [vmem:[#allocation5 + $0xa0] sm:$0xff] %v769
        %778 = vst [vmem:[#allocation5 + $0xe8] sm:$0xff] %v770
        %779 = vst [vmem:[#allocation5 + $0x130] sm:$0xff] %v771
        %780 = vst [vmem:[#allocation5 + $0x178] sm:$0xff] %v772
        %781 = vst [vmem:[#allocation5 + $0x1c0] sm:$0xff] %v773
        %782 = vst [vmem:[#allocation5 + $0x208] sm:$0xff] %v774
        %s783 = scalar_lea.vmem [#allocation4], 48
        %v784 = vld [vmem:[%s783] sm:$0xff]
        %v785 = vld [vmem:[%s783 + $0x8] sm:$0xff]
        %v786 = vld [vmem:[%s783 + $0x18] sm:$0xff]
        %v787 = vld [vmem:[%s783 + $0x20] sm:$0xff]
        %v788 = vld [vmem:[%s783 + $0x30] sm:$0xff]
        %v789 = vld [vmem:[%s783 + $0x38] sm:$0xff]
        %v790 = vld [vmem:[%s783 + $0x48] sm:$0xff]
        %v791 = vld [vmem:[%s783 + $0x50] sm:$0xff]
        %792 = vst [vmem:[#allocation5 + $0x18] sm:$0xff] %v784
        %793 = vst [vmem:[#allocation5 + $0x60] sm:$0xff] %v785
        %794 = vst [vmem:[#allocation5 + $0xa8] sm:$0xff] %v786
        %795 = vst [vmem:[#allocation5 + $0xf0] sm:$0xff] %v787
        %796 = vst [vmem:[#allocation5 + $0x138] sm:$0xff] %v788
        %797 = vst [vmem:[#allocation5 + $0x180] sm:$0xff] %v789
        %798 = vst [vmem:[#allocation5 + $0x1c8] sm:$0xff] %v790
        %799 = vst [vmem:[#allocation5 + $0x210] sm:$0xff] %v791
        %v800 = vld [vmem:[%s783 + $0x2] sm:$0xff]
        %v801 = vld [vmem:[%s783 + $0xa] sm:$0xff]
        %v802 = vld [vmem:[%s783 + $0x1a] sm:$0xff]
        %v803 = vld [vmem:[%s783 + $0x22] sm:$0xff]
        %v804 = vld [vmem:[%s783 + $0x32] sm:$0xff]
        %v805 = vld [vmem:[%s783 + $0x3a] sm:$0xff]
        %v806 = vld [vmem:[%s783 + $0x4a] sm:$0xff]
        %v807 = vld [vmem:[%s783 + $0x52] sm:$0xff]
        %808 = vst [vmem:[#allocation5 + $0x20] sm:$0xff] %v800
        %809 = vst [vmem:[#allocation5 + $0x68] sm:$0xff] %v801
        %810 = vst [vmem:[#allocation5 + $0xb0] sm:$0xff] %v802
        %811 = vst [vmem:[#allocation5 + $0xf8] sm:$0xff] %v803
        %812 = vst [vmem:[#allocation5 + $0x140] sm:$0xff] %v804
        %813 = vst [vmem:[#allocation5 + $0x188] sm:$0xff] %v805
        %814 = vst [vmem:[#allocation5 + $0x1d0] sm:$0xff] %v806
        %815 = vst [vmem:[#allocation5 + $0x218] sm:$0xff] %v807
        %v816 = vld [vmem:[%s783 + $0x4] sm:$0xff]
        %v817 = vld [vmem:[%s783 + $0xc] sm:$0xff]
        %v818 = vld [vmem:[%s783 + $0x1c] sm:$0xff]
        %v819 = vld [vmem:[%s783 + $0x24] sm:$0xff]
        %v820 = vld [vmem:[%s783 + $0x34] sm:$0xff]
        %v821 = vld [vmem:[%s783 + $0x3c] sm:$0xff]
        %v822 = vld [vmem:[%s783 + $0x4c] sm:$0xff]
        %v823 = vld [vmem:[%s783 + $0x54] sm:$0xff]
        %824 = vst [vmem:[#allocation5 + $0x28] sm:$0xff] %v816
        %825 = vst [vmem:[#allocation5 + $0x70] sm:$0xff] %v817
        %826 = vst [vmem:[#allocation5 + $0xb8] sm:$0xff] %v818
        %827 = vst [vmem:[#allocation5 + $0x100] sm:$0xff] %v819
        %828 = vst [vmem:[#allocation5 + $0x148] sm:$0xff] %v820
        %829 = vst [vmem:[#allocation5 + $0x190] sm:$0xff] %v821
        %830 = vst [vmem:[#allocation5 + $0x1d8] sm:$0xff] %v822
        %831 = vst [vmem:[#allocation5 + $0x220] sm:$0xff] %v823
        %s832 = scalar_lea.vmem [#allocation4], 96
        %v833 = vld [vmem:[%s832] sm:$0xff]
        %v834 = vld [vmem:[%s832 + $0x8] sm:$0xff]
        %v835 = vld [vmem:[%s832 + $0x18] sm:$0xff]
        %v836 = vld [vmem:[%s832 + $0x20] sm:$0xff]
        %v837 = vld [vmem:[%s832 + $0x30] sm:$0xff]
        %v838 = vld [vmem:[%s832 + $0x38] sm:$0xff]
        %v839 = vld [vmem:[%s832 + $0x48] sm:$0xff]
        %v840 = vld [vmem:[%s832 + $0x50] sm:$0xff]
        %841 = vst [vmem:[#allocation5 + $0x30] sm:$0xff] %v833
        %842 = vst [vmem:[#allocation5 + $0x78] sm:$0xff] %v834
        %843 = vst [vmem:[#allocation5 + $0xc0] sm:$0xff] %v835
        %844 = vst [vmem:[#allocation5 + $0x108] sm:$0xff] %v836
        %845 = vst [vmem:[#allocation5 + $0x150] sm:$0xff] %v837
        %846 = vst [vmem:[#allocation5 + $0x198] sm:$0xff] %v838
        %847 = vst [vmem:[#allocation5 + $0x1e0] sm:$0xff] %v839
        %848 = vst [vmem:[#allocation5 + $0x228] sm:$0xff] %v840
        %v849 = vld [vmem:[%s832 + $0x2] sm:$0xff]
        %v850 = vld [vmem:[%s832 + $0xa] sm:$0xff]
        %v851 = vld [vmem:[%s832 + $0x1a] sm:$0xff]
        %v852 = vld [vmem:[%s832 + $0x22] sm:$0xff]
        %v853 = vld [vmem:[%s832 + $0x32] sm:$0xff]
        %v854 = vld [vmem:[%s832 + $0x3a] sm:$0xff]
        %v855 = vld [vmem:[%s832 + $0x4a] sm:$0xff]
        %v856 = vld [vmem:[%s832 + $0x52] sm:$0xff]
        %857 = vst [vmem:[#allocation5 + $0x38] sm:$0xff] %v849
        %858 = vst [vmem:[#allocation5 + $0x80] sm:$0xff] %v850
        %859 = vst [vmem:[#allocation5 + $0xc8] sm:$0xff] %v851
        %860 = vst [vmem:[#allocation5 + $0x110] sm:$0xff] %v852
        %861 = vst [vmem:[#allocation5 + $0x158] sm:$0xff] %v853
        %862 = vst [vmem:[#allocation5 + $0x1a0] sm:$0xff] %v854
        %863 = vst [vmem:[#allocation5 + $0x1e8] sm:$0xff] %v855
        %864 = vst [vmem:[#allocation5 + $0x230] sm:$0xff] %v856
        %v865 = vld [vmem:[%s832 + $0x4] sm:$0xff]
        %v866 = vld [vmem:[%s832 + $0xc] sm:$0xff]
        %v867 = vld [vmem:[%s832 + $0x1c] sm:$0xff]
        %v868 = vld [vmem:[%s832 + $0x24] sm:$0xff]
        %v869 = vld [vmem:[%s832 + $0x34] sm:$0xff]
        %v870 = vld [vmem:[%s832 + $0x3c] sm:$0xff]
        %v871 = vld [vmem:[%s832 + $0x4c] sm:$0xff]
        %v872 = vld [vmem:[%s832 + $0x54] sm:$0xff]
        %873 = vst [vmem:[#allocation5 + $0x40] sm:$0xff] %v865
        %874 = vst [vmem:[#allocation5 + $0x88] sm:$0xff] %v866
        %875 = vst [vmem:[#allocation5 + $0xd0] sm:$0xff] %v867
        %876 = vst [vmem:[#allocation5 + $0x118] sm:$0xff] %v868
        %877 = vst [vmem:[#allocation5 + $0x160] sm:$0xff] %v869
        %878 = vst [vmem:[#allocation5 + $0x1a8] sm:$0xff] %v870
        %879 = vst [vmem:[#allocation5 + $0x1f0] sm:$0xff] %v871
        %880 = vst [vmem:[#allocation5 + $0x238] sm:$0xff] %v872
        %v881 = vld [vmem:[#allocation5] sm:$0xff]
        %v882 = vld [vmem:[#allocation5 + $0x8] sm:$0xff]
        %v883 = vld [vmem:[#allocation5 + $0x10] sm:$0xff]
        %v884 = vld [vmem:[#allocation5 + $0x18] sm:$0xff]
        %v885 = vld [vmem:[#allocation5 + $0x20] sm:$0xff]
        %v886 = vld [vmem:[#allocation5 + $0x28] sm:$0xff]
        %v887 = vld [vmem:[#allocation5 + $0x30] sm:$0xff]
        %v888 = vld [vmem:[#allocation5 + $0x38] sm:$0xff]
        %v889 = vld [vmem:[#allocation5 + $0x40] sm:$0xff]
        %v890 = vld [vmem:[#allocation5 + $0x48] sm:$0xff]
        %v891 = vld [vmem:[#allocation5 + $0x50] sm:$0xff]
        %v892 = vld [vmem:[#allocation5 + $0x58] sm:$0xff]
        %v893 = vld [vmem:[#allocation5 + $0x60] sm:$0xff]
        %v894 = vld [vmem:[#allocation5 + $0x68] sm:$0xff]
        %v895 = vld [vmem:[#allocation5 + $0x70] sm:$0xff]
        %v896 = vld [vmem:[#allocation5 + $0x78] sm:$0xff]
        %v897 = vld [vmem:[#allocation5 + $0x80] sm:$0xff]
        %v898 = vld [vmem:[#allocation5 + $0x88] sm:$0xff]
        %v899 = vld [vmem:[#allocation5 + $0x90] sm:$0xff]
        %v900 = vld [vmem:[#allocation5 + $0x98] sm:$0xff]
        %v901 = vld [vmem:[#allocation5 + $0xa0] sm:$0xff]
        %v902 = vld [vmem:[#allocation5 + $0xa8] sm:$0xff]
        %v903 = vld [vmem:[#allocation5 + $0xb0] sm:$0xff]
        %v904 = vld [vmem:[#allocation5 + $0xb8] sm:$0xff]
        %v905 = vld [vmem:[#allocation5 + $0xc0] sm:$0xff]
        %v906 = vld [vmem:[#allocation5 + $0xc8] sm:$0xff]
        %v907 = vld [vmem:[#allocation5 + $0xd0] sm:$0xff]
        %v908 = vld [vmem:[#allocation5 + $0xd8] sm:$0xff]
        %v909 = vld [vmem:[#allocation5 + $0xe0] sm:$0xff]
        %v910 = vld [vmem:[#allocation5 + $0xe8] sm:$0xff]
        %v911 = vld [vmem:[#allocation5 + $0xf0] sm:$0xff]
        %v912 = vld [vmem:[#allocation5 + $0xf8] sm:$0xff]
        %v913 = vld [vmem:[#allocation5 + $0x100] sm:$0xff]
        %v914 = vld [vmem:[#allocation5 + $0x108] sm:$0xff]
        %v915 = vld [vmem:[#allocation5 + $0x110] sm:$0xff]
        %v916 = vld [vmem:[#allocation5 + $0x118] sm:$0xff]
        %v917 = vld [vmem:[#allocation5 + $0x120] sm:$0xff]
        %v918 = vld [vmem:[#allocation5 + $0x128] sm:$0xff]
        %v919 = vld [vmem:[#allocation5 + $0x130] sm:$0xff]
        %v920 = vld [vmem:[#allocation5 + $0x138] sm:$0xff]
        %v921 = vld [vmem:[#allocation5 + $0x140] sm:$0xff]
        %v922 = vld [vmem:[#allocation5 + $0x148] sm:$0xff]
        %v923 = vld [vmem:[#allocation5 + $0x150] sm:$0xff]
        %v924 = vld [vmem:[#allocation5 + $0x158] sm:$0xff]
        %v925 = vld [vmem:[#allocation5 + $0x160] sm:$0xff]
        %v926 = vld [vmem:[#allocation5 + $0x168] sm:$0xff]
        %v927 = vld [vmem:[#allocation5 + $0x170] sm:$0xff]
        %v928 = vld [vmem:[#allocation5 + $0x178] sm:$0xff]
        %v929 = vld [vmem:[#allocation5 + $0x180] sm:$0xff]
        %v930 = vld [vmem:[#allocation5 + $0x188] sm:$0xff]
        %v931 = vld [vmem:[#allocation5 + $0x190] sm:$0xff]
        %v932 = vld [vmem:[#allocation5 + $0x198] sm:$0xff]
        %v933 = vld [vmem:[#allocation5 + $0x1a0] sm:$0xff]
        %v934 = vld [vmem:[#allocation5 + $0x1a8] sm:$0xff]
        %v935 = vld [vmem:[#allocation5 + $0x1b0] sm:$0xff]
        %v936 = vld [vmem:[#allocation5 + $0x1b8] sm:$0xff]
        %v937 = vld [vmem:[#allocation5 + $0x1c0] sm:$0xff]
        %v938 = vld [vmem:[#allocation5 + $0x1c8] sm:$0xff]
        %v939 = vld [vmem:[#allocation5 + $0x1d0] sm:$0xff]
        %v940 = vld [vmem:[#allocation5 + $0x1d8] sm:$0xff]
        %v941 = vld [vmem:[#allocation5 + $0x1e0] sm:$0xff]
        %v942 = vld [vmem:[#allocation5 + $0x1e8] sm:$0xff]
        %v943 = vld [vmem:[#allocation5 + $0x1f0] sm:$0xff]
        %v944 = vld [vmem:[#allocation5 + $0x1f8] sm:$0xff]
        %v945 = vld [vmem:[#allocation5 + $0x200] sm:$0xff]
        %v946 = vld [vmem:[#allocation5 + $0x208] sm:$0xff]
        %v947 = vld [vmem:[#allocation5 + $0x210] sm:$0xff]
        %v948 = vld [vmem:[#allocation5 + $0x218] sm:$0xff]
        %v949 = vld [vmem:[#allocation5 + $0x220] sm:$0xff]
        %v950 = vld [vmem:[#allocation5 + $0x228] sm:$0xff]
        %v951 = vld [vmem:[#allocation5 + $0x230] sm:$0xff]
        %v952 = vld [vmem:[#allocation5 + $0x238] sm:$0xff]
        %v953 = vld [vmem:[%s3] sm:$0xff]
        %v954 = vld [vmem:[%s3 + $0x8] sm:$0xff]
        %v955 = vld [vmem:[%s3 + $0x10] sm:$0xff]
        %v956 = vld [vmem:[%s3 + $0x18] sm:$0xff]
        %v957 = vld [vmem:[%s3 + $0x20] sm:$0xff]
        %v958 = vld [vmem:[%s3 + $0x28] sm:$0xff]
        %v959 = vld [vmem:[%s3 + $0x30] sm:$0xff]
        %v960 = vld [vmem:[%s3 + $0x38] sm:$0xff]
        %v961 = vld [vmem:[%s3 + $0x40] sm:$0xff]
        %v962 = vld [vmem:[%s3 + $0x48] sm:$0xff]
        %v963 = vld [vmem:[%s3 + $0x50] sm:$0xff]
        %v964 = vld [vmem:[%s3 + $0x58] sm:$0xff]
        %v965 = vld [vmem:[%s3 + $0x60] sm:$0xff]
        %v966 = vld [vmem:[%s3 + $0x68] sm:$0xff]
        %v967 = vld [vmem:[%s3 + $0x70] sm:$0xff]
        %v968 = vld [vmem:[%s3 + $0x78] sm:$0xff]
        %v969 = vld [vmem:[%s3 + $0x80] sm:$0xff]
        %v970 = vld [vmem:[%s3 + $0x88] sm:$0xff]
        %v971 = vld [vmem:[%s3 + $0x90] sm:$0xff]
        %v972 = vld [vmem:[%s3 + $0x98] sm:$0xff]
        %v973 = vld [vmem:[%s3 + $0xa0] sm:$0xff]
        %v974 = vld [vmem:[%s3 + $0xa8] sm:$0xff]
        %v975 = vld [vmem:[%s3 + $0xb0] sm:$0xff]
        %v976 = vld [vmem:[%s3 + $0xb8] sm:$0xff]
        %v977 = vld [vmem:[%s3 + $0xc0] sm:$0xff]
        %v978 = vld [vmem:[%s3 + $0xc8] sm:$0xff]
        %v979 = vld [vmem:[%s3 + $0xd0] sm:$0xff]
        %v980 = vld [vmem:[%s3 + $0xd8] sm:$0xff]
        %v981 = vld [vmem:[%s3 + $0xe0] sm:$0xff]
        %v982 = vld [vmem:[%s3 + $0xe8] sm:$0xff]
        %v983 = vld [vmem:[%s3 + $0xf0] sm:$0xff]
        %v984 = vld [vmem:[%s3 + $0xf8] sm:$0xff]
        %v985 = vld [vmem:[%s3 + $0x100] sm:$0xff]
        %v986 = vld [vmem:[%s3 + $0x108] sm:$0xff]
        %v987 = vld [vmem:[%s3 + $0x110] sm:$0xff]
        %v988 = vld [vmem:[%s3 + $0x118] sm:$0xff]
        %v989 = vld [vmem:[%s3 + $0x120] sm:$0xff]
        %v990 = vld [vmem:[%s3 + $0x128] sm:$0xff]
        %v991 = vld [vmem:[%s3 + $0x130] sm:$0xff]
        %v992 = vld [vmem:[%s3 + $0x138] sm:$0xff]
        %v993 = vld [vmem:[%s3 + $0x140] sm:$0xff]
        %v994 = vld [vmem:[%s3 + $0x148] sm:$0xff]
        %v995 = vld [vmem:[%s3 + $0x150] sm:$0xff]
        %v996 = vld [vmem:[%s3 + $0x158] sm:$0xff]
        %v997 = vld [vmem:[%s3 + $0x160] sm:$0xff]
        %v998 = vld [vmem:[%s3 + $0x168] sm:$0xff]
        %v999 = vld [vmem:[%s3 + $0x170] sm:$0xff]
        %v1000 = vld [vmem:[%s3 + $0x178] sm:$0xff]
        %v1001 = vld [vmem:[%s3 + $0x180] sm:$0xff]
        %v1002 = vld [vmem:[%s3 + $0x188] sm:$0xff]
        %v1003 = vld [vmem:[%s3 + $0x190] sm:$0xff]
        %v1004 = vld [vmem:[%s3 + $0x198] sm:$0xff]
        %v1005 = vld [vmem:[%s3 + $0x1a0] sm:$0xff]
        %v1006 = vld [vmem:[%s3 + $0x1a8] sm:$0xff]
        %v1007 = vld [vmem:[%s3 + $0x1b0] sm:$0xff]
        %v1008 = vld [vmem:[%s3 + $0x1b8] sm:$0xff]
        %v1009 = vld [vmem:[%s3 + $0x1c0] sm:$0xff]
        %v1010 = vld [vmem:[%s3 + $0x1c8] sm:$0xff]
        %v1011 = vld [vmem:[%s3 + $0x1d0] sm:$0xff]
        %v1012 = vld [vmem:[%s3 + $0x1d8] sm:$0xff]
        %v1013 = vld [vmem:[%s3 + $0x1e0] sm:$0xff]
        %v1014 = vld [vmem:[%s3 + $0x1e8] sm:$0xff]
        %v1015 = vld [vmem:[%s3 + $0x1f0] sm:$0xff]
        %v1016 = vld [vmem:[%s3 + $0x1f8] sm:$0xff]
        %v1017 = vld [vmem:[%s3 + $0x200] sm:$0xff]
        %v1018 = vld [vmem:[%s3 + $0x208] sm:$0xff]
        %v1019 = vld [vmem:[%s3 + $0x210] sm:$0xff]
        %v1020 = vld [vmem:[%s3 + $0x218] sm:$0xff]
        %v1021 = vld [vmem:[%s3 + $0x220] sm:$0xff]
        %v1022 = vld [vmem:[%s3 + $0x228] sm:$0xff]
        %v1023 = vld [vmem:[%s3 + $0x230] sm:$0xff]
        %v1024 = vld [vmem:[%s3 + $0x238] sm:$0xff]
        %v1025 = vld [vmem:[%s3 + $0x240] sm:$0xff]
        %v1026 = vld [vmem:[%s3 + $0x248] sm:$0xff]
        %v1027 = vld [vmem:[%s3 + $0x250] sm:$0xff]
        %v1028 = vld [vmem:[%s3 + $0x258] sm:$0xff]
        %v1029 = vld [vmem:[%s3 + $0x260] sm:$0xff]
        %v1030 = vld [vmem:[%s3 + $0x268] sm:$0xff]
        %v1031 = vld [vmem:[%s3 + $0x270] sm:$0xff]
        %v1032 = vld [vmem:[%s3 + $0x278] sm:$0xff]
        %v1033 = vld [vmem:[%s3 + $0x280] sm:$0xff]
        %v1034 = vld [vmem:[%s3 + $0x288] sm:$0xff]
        %v1035 = vld [vmem:[%s3 + $0x290] sm:$0xff]
        %v1036 = vld [vmem:[%s3 + $0x298] sm:$0xff]
        %v1037 = vld [vmem:[%s3 + $0x2a0] sm:$0xff]
        %v1038 = vld [vmem:[%s3 + $0x2a8] sm:$0xff]
        %v1039 = vld [vmem:[%s3 + $0x2b0] sm:$0xff]
        %v1040 = vld [vmem:[%s3 + $0x2b8] sm:$0xff]
        %v1041 = vld [vmem:[%s3 + $0x2c0] sm:$0xff]
        %v1042 = vld [vmem:[%s3 + $0x2c8] sm:$0xff]
        %v1043 = vld [vmem:[%s3 + $0x2d0] sm:$0xff]
        %v1044 = vld [vmem:[%s3 + $0x2d8] sm:$0xff]
        %v1045 = vld [vmem:[%s3 + $0x2e0] sm:$0xff]
        %v1046 = vld [vmem:[%s3 + $0x2e8] sm:$0xff]
        %v1047 = vld [vmem:[%s3 + $0x2f0] sm:$0xff]
        %v1048 = vld [vmem:[%s3 + $0x2f8] sm:$0xff]
        %v1049 = vld [vmem:[%s3 + $0x300] sm:$0xff]
        %v1050 = vld [vmem:[%s3 + $0x308] sm:$0xff]
        %v1051 = vld [vmem:[%s3 + $0x310] sm:$0xff]
        %v1052 = vld [vmem:[%s3 + $0x318] sm:$0xff]
        %v1053 = vld [vmem:[%s3 + $0x320] sm:$0xff]
        %v1054 = vld [vmem:[%s3 + $0x328] sm:$0xff]
        %v1055 = vld [vmem:[%s3 + $0x330] sm:$0xff]
        %v1056 = vld [vmem:[%s3 + $0x338] sm:$0xff]
        %v1057 = vld [vmem:[%s3 + $0x340] sm:$0xff]
        %v1058 = vld [vmem:[%s3 + $0x348] sm:$0xff]
        %v1059 = vld [vmem:[%s3 + $0x350] sm:$0xff]
        %v1060 = vld [vmem:[%s3 + $0x358] sm:$0xff]
        %v1061 = vld [vmem:[%s3 + $0x360] sm:$0xff]
        %v1062 = vld [vmem:[%s3 + $0x368] sm:$0xff]
        %v1063 = vld [vmem:[%s3 + $0x370] sm:$0xff]
        %v1064 = vld [vmem:[%s3 + $0x378] sm:$0xff]
        %v1065 = vld [vmem:[%s3 + $0x380] sm:$0xff]
        %v1066 = vld [vmem:[%s3 + $0x388] sm:$0xff]
        %v1067 = vld [vmem:[%s3 + $0x390] sm:$0xff]
        %v1068 = vld [vmem:[%s3 + $0x398] sm:$0xff]
        %v1069 = vld [vmem:[%s3 + $0x3a0] sm:$0xff]
        %v1070 = vld [vmem:[%s3 + $0x3a8] sm:$0xff]
        %v1071 = vld [vmem:[%s3 + $0x3b0] sm:$0xff]
        %v1072 = vld [vmem:[%s3 + $0x3b8] sm:$0xff]
        %v1073 = vld [vmem:[%s3 + $0x3c0] sm:$0xff]
        %v1074 = vld [vmem:[%s3 + $0x3c8] sm:$0xff]
        %v1075 = vld [vmem:[%s3 + $0x3d0] sm:$0xff]
        %v1076 = vld [vmem:[%s3 + $0x3d8] sm:$0xff]
        %v1077 = vld [vmem:[%s3 + $0x3e0] sm:$0xff]
        %v1078 = vld [vmem:[%s3 + $0x3e8] sm:$0xff]
        %v1079 = vld [vmem:[%s3 + $0x3f0] sm:$0xff]
        %v1080 = vld [vmem:[%s3 + $0x3f8] sm:$0xff]
        %v1081 = vld [vmem:[%s3 + $0x400] sm:$0xff]
        %v1082 = vld [vmem:[%s3 + $0x408] sm:$0xff]
        %v1083 = vld [vmem:[%s3 + $0x410] sm:$0xff]
        %v1084 = vld [vmem:[%s3 + $0x418] sm:$0xff]
        %v1085 = vld [vmem:[%s3 + $0x420] sm:$0xff]
        %v1086 = vld [vmem:[%s3 + $0x428] sm:$0xff]
        %v1087 = vld [vmem:[%s3 + $0x430] sm:$0xff]
        %v1088 = vld [vmem:[%s3 + $0x438] sm:$0xff]
        %v1089 = vld [vmem:[%s3 + $0x440] sm:$0xff]
        %v1090 = vld [vmem:[%s3 + $0x448] sm:$0xff]
        %v1091 = vld [vmem:[%s3 + $0x450] sm:$0xff]
        %v1092 = vld [vmem:[%s3 + $0x458] sm:$0xff]
        %v1093 = vld [vmem:[%s3 + $0x460] sm:$0xff]
        %v1094 = vld [vmem:[%s3 + $0x468] sm:$0xff]
        %v1095 = vld [vmem:[%s3 + $0x470] sm:$0xff]
        %v1096 = vld [vmem:[%s3 + $0x478] sm:$0xff]
        %v1097 = vld [vmem:[%s4] sm:$0x1]
        %v1099 = vlaneseq
        %v1100 = vshrl.u32 %v1099, 7
        %v1101 = vsub.s32 0, %v1100
        %v1102 = vrot.slane %v1097, %v1101
        %1104 = vmatprep.subr.mxu0 0.0
        %1105 = vmatpush1.msra.mxu0 %v953
        %1106 = vmatprep.subr.mxu0 0.0
        %1107 = vmatpush1.msra.mxu0 %v954
        %1108 = vmatprep.subr.mxu0 0.0
        %1109 = vmatpush1.msra.mxu0 %v955
        %1110 = vmatprep.subr.mxu0 0.0
        %1111 = vmatpush1.msra.mxu0 %v956
        %1112 = vmatprep.subr.mxu0 0.0
        %1113 = vmatpush1.msra.mxu0 %v957
        %1114 = vmatprep.subr.mxu0 0.0
        %1115 = vmatpush1.msra.mxu0 %v958
        %1116 = vmatprep.subr.mxu0 0.0
        %1117 = vmatpush1.msra.mxu0 %v959
        %1118 = vmatprep.subr.mxu0 0.0
        %1119 = vmatpush1.msra.mxu0 %v960
        %1120 = vmatprep.subr.mxu0 0.0
        %1121 = vmatpush1.msra.mxu0 %v961
        %1122 = vmatprep.subr.mxu0 0.0
        %1123 = vmatpush1.msra.mxu0 %v962
        %1124 = vmatprep.subr.mxu0 0.0
        %1125 = vmatpush1.msra.mxu0 %v963
        %1126 = vmatprep.subr.mxu0 0.0
        %1127 = vmatpush1.msra.mxu0 %v964
        %1128 = vmatprep.subr.mxu0 0.0
        %1129 = vmatpush1.msra.mxu0 %v965
        %1130 = vmatprep.subr.mxu0 0.0
        %1131 = vmatpush1.msra.mxu0 %v966
        %1132 = vmatprep.subr.mxu0 0.0
        %1133 = vmatpush1.msra.mxu0 %v967
        %1134 = vmatprep.subr.mxu0 0.0
        %1135 = vmatpush1.msra.mxu0 %v968
        %1136 = vmatprep.subr.mxu0 0.0
        %1137 = vmatpush1.msra.mxu0 %v969
        %1138 = vmatprep.subr.mxu0 0.0
        %1139 = vmatpush1.msra.mxu0 %v970
        %1140 = vmatprep.subr.mxu0 0.0
        %1141 = vmatpush1.msra.mxu0 %v971
        %1142 = vmatprep.subr.mxu0 0.0
        %1143 = vmatpush1.msra.mxu0 %v972
        %1144 = vmatprep.subr.mxu0 0.0
        %1145 = vmatpush1.msra.mxu0 %v973
        %1146 = vmatprep.subr.mxu0 0.0
        %1147 = vmatpush1.msra.mxu0 %v974
        %1148 = vmatprep.subr.mxu0 0.0
        %1149 = vmatpush1.msra.mxu0 %v975
        %1150 = vmatprep.subr.mxu0 0.0
        %1151 = vmatpush1.msra.mxu0 %v976
        %1152 = vmatprep.subr.mxu0 0.0
        %1153 = vmatpush1.msra.mxu0 %v977
        %1154 = vmatprep.subr.mxu0 0.0
        %1155 = vmatpush1.msra.mxu0 %v978
        %1156 = vmatprep.subr.mxu0 0.0
        %1157 = vmatpush1.msra.mxu0 %v979
        %1158 = vmatprep.subr.mxu0 0.0
        %1159 = vmatpush1.msra.mxu0 %v980
        %1160 = vmatprep.subr.mxu0 0.0
        %1161 = vmatpush1.msra.mxu0 %v981
        %1162 = vmatprep.subr.mxu0 0.0
        %1163 = vmatpush1.msra.mxu0 %v982
        %1164 = vmatprep.subr.mxu0 0.0
        %1165 = vmatpush1.msra.mxu0 %v983
        %1166 = vmatprep.subr.mxu0 0.0
        %1167 = vmatpush1.msra.mxu0 %v984
        %1168 = vmatprep.mubr.f32.mxu0 %v882
        %1169 = vmatmul.mubr.f32.gmra.mrb[0].mxu0 %v881
        %v1170 = vpop.f32.mrb[0].mxu0
        %v1171 = vadd.f32 %v1102, %v1170
        %v1172 = vpop.f32.mrb[0].mxu0
        %1173 = vmatprep.mubr.f32.mxu0 %v891
        %1174 = vmatmul.mubr.f32.gmra.mrb[0].mxu0 %v890
        %v1175 = vpop.f32.mrb[0].mxu0
        %v1176 = vadd.f32 %v1102, %v1175
        %v1177 = vpop.f32.mrb[0].mxu0
        %1178 = vmatprep.mubr.f32.mxu0 %v900
        %1179 = vmatmul.mubr.f32.gmra.mrb[0].mxu0 %v899
        %v1180 = vpop.f32.mrb[0].mxu0
        %v1181 = vadd.f32 %v1102, %v1180
        %v1182 = vpop.f32.mrb[0].mxu0
        %1183 = vmatprep.mubr.f32.mxu0 %v909
        %1184 = vmatmul.mubr.f32.gmra.mrb[0].mxu0 %v908
        %v1185 = vpop.f32.mrb[0].mxu0
        %v1186 = vadd.f32 %v1102, %v1185
        %v1187 = vpop.f32.mrb[0].mxu0
        %1188 = vmatprep.mubr.f32.mxu0 %v918
        %1189 = vmatmul.mubr.f32.gmra.mrb[0].mxu0 %v917
        %v1190 = vpop.f32.mrb[0].mxu0
        %v1191 = vadd.f32 %v1102, %v1190
        %v1192 = vpop.f32.mrb[0].mxu0
        %1193 = vmatprep.mubr.f32.mxu0 %v927
        %1194 = vmatmul.mubr.f32.gmra.mrb[0].mxu0 %v926
        %v1195 = vpop.f32.mrb[0].mxu0
        %v1196 = vadd.f32 %v1102, %v1195
        %v1197 = vpop.f32.mrb[0].mxu0
        %1198 = vmatprep.mubr.f32.mxu0 %v936
        %1199 = vmatmul.mubr.f32.gmra.mrb[0].mxu0 %v935
        %v1200 = vpop.f32.mrb[0].mxu0
        %v1201 = vadd.f32 %v1102, %v1200
        %v1202 = vpop.f32.mrb[0].mxu0
        %1203 = vmatprep.mubr.f32.mxu0 %v945
        %1204 = vmatmul.mubr.f32.gmra.mrb[0].mxu0 %v944
        %v1205 = vpop.f32.mrb[0].mxu0
        %v1206 = vadd.f32 %v1102, %v1205
        %v1207 = vpop.f32.mrb[0].mxu0
        %1208 = vdwg.mxu0
        %1209 = vmatprep.subr.mxu0 0.0
        %1210 = vmatpush1.msra.mxu0 %v985
        %1211 = vmatprep.subr.mxu0 0.0
        %1212 = vmatpush1.msra.mxu0 %v986
        %1213 = vmatprep.subr.mxu0 0.0
        %1214 = vmatpush1.msra.mxu0 %v987
        %1215 = vmatprep.subr.mxu0 0.0
        %1216 = vmatpush1.msra.mxu0 %v988
        %1217 = vmatprep.subr.mxu0 0.0
        %1218 = vmatpush1.msra.mxu0 %v989
        %1219 = vmatprep.subr.mxu0 0.0
        %1220 = vmatpush1.msra.mxu0 %v990
        %1221 = vmatprep.subr.mxu0 0.0
        %1222 = vmatpush1.msra.mxu0 %v991
        %1223 = vmatprep.subr.mxu0 0.0
        %1224 = vmatpush1.msra.mxu0 %v992
        %1225 = vmatprep.subr.mxu0 0.0
        %1226 = vmatpush1.msra.mxu0 %v993
        %1227 = vmatprep.subr.mxu0 0.0
        %1228 = vmatpush1.msra.mxu0 %v994
        %1229 = vmatprep.subr.mxu0 0.0
        %1230 = vmatpush1.msra.mxu0 %v995
        %1231 = vmatprep.subr.mxu0 0.0
        %1232 = vmatpush1.msra.mxu0 %v996
        %1233 = vmatprep.subr.mxu0 0.0
        %1234 = vmatpush1.msra.mxu0 %v997
        %1235 = vmatprep.subr.mxu0 0.0
        %1236 = vmatpush1.msra.mxu0 %v998
        %1237 = vmatprep.subr.mxu0 0.0
        %1238 = vmatpush1.msra.mxu0 %v999
        %1239 = vmatprep.subr.mxu0 0.0
        %1240 = vmatpush1.msra.mxu0 %v1000
        %1241 = vmatprep.subr.mxu0 0.0
        %1242 = vmatpush1.msra.mxu0 %v1001
        %1243 = vmatprep.subr.mxu0 0.0
        %1244 = vmatpush1.msra.mxu0 %v1002
        %1245 = vmatprep.subr.mxu0 0.0
        %1246 = vmatpush1.msra.mxu0 %v1003
        %1247 = vmatprep.subr.mxu0 0.0
        %1248 = vmatpush1.msra.mxu0 %v1004
        %1249 = vmatprep.subr.mxu0 0.0
        %1250 = vmatpush1.msra.mxu0 %v1005
        %1251 = vmatprep.subr.mxu0 0.0
        %1252 = vmatpush1.msra.mxu0 %v1006
        %1253 = vmatprep.subr.mxu0 0.0
        %1254 = vmatpush1.msra.mxu0 %v1007
        %1255 = vmatprep.subr.mxu0 0.0
        %1256 = vmatpush1.msra.mxu0 %v1008
        %1257 = vmatprep.subr.mxu0 0.0
        %1258 = vmatpush1.msra.mxu0 %v1009
        %1259 = vmatprep.subr.mxu0 0.0
        %1260 = vmatpush1.msra.mxu0 %v1010
        %1261 = vmatprep.subr.mxu0 0.0
        %1262 = vmatpush1.msra.mxu0 %v1011
        %1263 = vmatprep.subr.mxu0 0.0
        %1264 = vmatpush1.msra.mxu0 %v1012
        %1265 = vmatprep.subr.mxu0 0.0
        %1266 = vmatpush1.msra.mxu0 %v1013
        %1267 = vmatprep.subr.mxu0 0.0
        %1268 = vmatpush1.msra.mxu0 %v1014
        %1269 = vmatprep.subr.mxu0 0.0
        %1270 = vmatpush1.msra.mxu0 %v1015
        %1271 = vmatprep.subr.mxu0 0.0
        %1272 = vmatpush1.msra.mxu0 %v1016
        %1273 = vmatprep.mubr.f32.mxu0 %v884
        %1274 = vmatmul.mubr.f32.gmra.mrb[0].mxu0 %v883
        %v1275 = vpop.f32.mrb[0].mxu0
        %v1276 = vadd.f32 %v1171, %v1275
        %v1277 = vpop.f32.mrb[0].mxu0
        %1278 = vmatprep.mubr.f32.mxu0 %v893
        %1279 = vmatmul.mubr.f32.gmra.mrb[0].mxu0 %v892
        %v1280 = vpop.f32.mrb[0].mxu0
        %v1281 = vadd.f32 %v1176, %v1280
        %v1282 = vpop.f32.mrb[0].mxu0
        %1283 = vmatprep.mubr.f32.mxu0 %v902
        %1284 = vmatmul.mubr.f32.gmra.mrb[0].mxu0 %v901
        %v1285 = vpop.f32.mrb[0].mxu0
        %v1286 = vadd.f32 %v1181, %v1285
        %v1287 = vpop.f32.mrb[0].mxu0
        %1288 = vmatprep.mubr.f32.mxu0 %v911
        %1289 = vmatmul.mubr.f32.gmra.mrb[0].mxu0 %v910
        %v1290 = vpop.f32.mrb[0].mxu0
        %v1291 = vadd.f32 %v1186, %v1290
        %v1292 = vpop.f32.mrb[0].mxu0
        %1293 = vmatprep.mubr.f32.mxu0 %v920
        %1294 = vmatmul.mubr.f32.gmra.mrb[0].mxu0 %v919
        %v1295 = vpop.f32.mrb[0].mxu0
        %v1296 = vadd.f32 %v1191, %v1295
        %v1297 = vpop.f32.mrb[0].mxu0
        %1298 = vmatprep.mubr.f32.mxu0 %v929
        %1299 = vmatmul.mubr.f32.gmra.mrb[0].mxu0 %v928
        %v1300 = vpop.f32.mrb[0].mxu0
        %v1301 = vadd.f32 %v1196, %v1300
        %v1302 = vpop.f32.mrb[0].mxu0
        %1303 = vmatprep.mubr.f32.mxu0 %v938
        %1304 = vmatmul.mubr.f32.gmra.mrb[0].mxu0 %v937
        %v1305 = vpop.f32.mrb[0].mxu0
        %v1306 = vadd.f32 %v1201, %v1305
        %v1307 = vpop.f32.mrb[0].mxu0
        %1308 = vmatprep.mubr.f32.mxu0 %v947
        %1309 = vmatmul.mubr.f32.gmra.mrb[0].mxu0 %v946
        %v1310 = vpop.f32.mrb[0].mxu0
        %v1311 = vadd.f32 %v1206, %v1310
        %v1312 = vpop.f32.mrb[0].mxu0
        %1313 = vdwg.mxu0
        %1314 = vmatprep.subr.mxu0 0.0
        %1315 = vmatpush1.msra.mxu0 %v1017
        %1316 = vmatprep.subr.mxu0 0.0
        %1317 = vmatpush1.msra.mxu0 %v1018
        %1318 = vmatprep.subr.mxu0 0.0
        %1319 = vmatpush1.msra.mxu0 %v1019
        %1320 = vmatprep.subr.mxu0 0.0
        %1321 = vmatpush1.msra.mxu0 %v1020
        %1322 = vmatprep.subr.mxu0 0.0
        %1323 = vmatpush1.msra.mxu0 %v1021
        %1324 = vmatprep.subr.mxu0 0.0
        %1325 = vmatpush1.msra.mxu0 %v1022
        %1326 = vmatprep.subr.mxu0 0.0
        %1327 = vmatpush1.msra.mxu0 %v1023
        %1328 = vmatprep.subr.mxu0 0.0
        %1329 = vmatpush1.msra.mxu0 %v1024
        %1330 = vmatprep.subr.mxu0 0.0
        %1331 = vmatpush1.msra.mxu0 %v1025
        %1332 = vmatprep.subr.mxu0 0.0
        %1333 = vmatpush1.msra.mxu0 %v1026
        %1334 = vmatprep.subr.mxu0 0.0
        %1335 = vmatpush1.msra.mxu0 %v1027
        %1336 = vmatprep.subr.mxu0 0.0
        %1337 = vmatpush1.msra.mxu0 %v1028
        %1338 = vmatprep.subr.mxu0 0.0
        %1339 = vmatpush1.msra.mxu0 %v1029
        %1340 = vmatprep.subr.mxu0 0.0
        %1341 = vmatpush1.msra.mxu0 %v1030
        %1342 = vmatprep.subr.mxu0 0.0
        %1343 = vmatpush1.msra.mxu0 %v1031
        %1344 = vmatprep.subr.mxu0 0.0
        %1345 = vmatpush1.msra.mxu0 %v1032
        %1346 = vmatprep.subr.mxu0 0.0
        %1347 = vmatpush1.msra.mxu0 %v1033
        %1348 = vmatprep.subr.mxu0 0.0
        %1349 = vmatpush1.msra.mxu0 %v1034
        %1350 = vmatprep.subr.mxu0 0.0
        %1351 = vmatpush1.msra.mxu0 %v1035
        %1352 = vmatprep.subr.mxu0 0.0
        %1353 = vmatpush1.msra.mxu0 %v1036
        %1354 = vmatprep.subr.mxu0 0.0
        %1355 = vmatpush1.msra.mxu0 %v1037
        %1356 = vmatprep.subr.mxu0 0.0
        %1357 = vmatpush1.msra.mxu0 %v1038
        %1358 = vmatprep.subr.mxu0 0.0
        %1359 = vmatpush1.msra.mxu0 %v1039
        %1360 = vmatprep.subr.mxu0 0.0
        %1361 = vmatpush1.msra.mxu0 %v1040
        %1362 = vmatprep.subr.mxu0 0.0
        %1363 = vmatpush1.msra.mxu0 %v1041
        %1364 = vmatprep.subr.mxu0 0.0
        %1365 = vmatpush1.msra.mxu0 %v1042
        %1366 = vmatprep.subr.mxu0 0.0
        %1367 = vmatpush1.msra.mxu0 %v1043
        %1368 = vmatprep.subr.mxu0 0.0
        %1369 = vmatpush1.msra.mxu0 %v1044
        %1370 = vmatprep.subr.mxu0 0.0
        %1371 = vmatpush1.msra.mxu0 %v1045
        %1372 = vmatprep.subr.mxu0 0.0
        %1373 = vmatpush1.msra.mxu0 %v1046
        %1374 = vmatprep.subr.mxu0 0.0
        %1375 = vmatpush1.msra.mxu0 %v1047
        %1376 = vmatprep.subr.mxu0 0.0
        %1377 = vmatpush1.msra.mxu0 %v1048
        %1378 = vmatprep.mubr.f32.mxu0 %v886
        %1379 = vmatmul.mubr.f32.gmra.mrb[0].mxu0 %v885
        %v1380 = vpop.f32.mrb[0].mxu0
        %v1381 = vadd.f32 %v1276, %v1380
        %v1382 = vpop.f32.mrb[0].mxu0
        %1383 = vmatprep.mubr.f32.mxu0 %v895
        %1384 = vmatmul.mubr.f32.gmra.mrb[0].mxu0 %v894
        %v1385 = vpop.f32.mrb[0].mxu0
        %v1386 = vadd.f32 %v1281, %v1385
        %v1387 = vpop.f32.mrb[0].mxu0
        %1388 = vmatprep.mubr.f32.mxu0 %v904
        %1389 = vmatmul.mubr.f32.gmra.mrb[0].mxu0 %v903
        %v1390 = vpop.f32.mrb[0].mxu0
        %v1391 = vadd.f32 %v1286, %v1390
        %v1392 = vpop.f32.mrb[0].mxu0
        %1393 = vmatprep.mubr.f32.mxu0 %v913
        %1394 = vmatmul.mubr.f32.gmra.mrb[0].mxu0 %v912
        %v1395 = vpop.f32.mrb[0].mxu0
        %v1396 = vadd.f32 %v1291, %v1395
        %v1397 = vpop.f32.mrb[0].mxu0
        %1398 = vmatprep.mubr.f32.mxu0 %v922
        %1399 = vmatmul.mubr.f32.gmra.mrb[0].mxu0 %v921
        %v1400 = vpop.f32.mrb[0].mxu0
        %v1401 = vadd.f32 %v1296, %v1400
        %v1402 = vpop.f32.mrb[0].mxu0
        %1403 = vmatprep.mubr.f32.mxu0 %v931
        %1404 = vmatmul.mubr.f32.gmra.mrb[0].mxu0 %v930
        %v1405 = vpop.f32.mrb[0].mxu0
        %v1406 = vadd.f32 %v1301, %v1405
        %v1407 = vpop.f32.mrb[0].mxu0
        %1408 = vmatprep.mubr.f32.mxu0 %v940
        %1409 = vmatmul.mubr.f32.gmra.mrb[0].mxu0 %v939
        %v1410 = vpop.f32.mrb[0].mxu0
        %v1411 = vadd.f32 %v1306, %v1410
        %v1412 = vpop.f32.mrb[0].mxu0
        %1413 = vmatprep.mubr.f32.mxu0 %v949
        %1414 = vmatmul.mubr.f32.gmra.mrb[0].mxu0 %v948
        %v1415 = vpop.f32.mrb[0].mxu0
        %v1416 = vadd.f32 %v1311, %v1415
        %v1417 = vpop.f32.mrb[0].mxu0
        %1418 = vdwg.mxu0
        %1419 = vmatprep.subr.mxu0 0.0
        %1420 = vmatpush1.msra.mxu0 %v1049
        %1421 = vmatprep.subr.mxu0 0.0
        %1422 = vmatpush1.msra.mxu0 %v1050
        %1423 = vmatprep.subr.mxu0 0.0
        %1424 = vmatpush1.msra.mxu0 %v1051
        %1425 = vmatprep.subr.mxu0 0.0
        %1426 = vmatpush1.msra.mxu0 %v1052
        %1427 = vmatprep.subr.mxu0 0.0
        %1428 = vmatpush1.msra.mxu0 %v1053
        %1429 = vmatprep.subr.mxu0 0.0
        %1430 = vmatpush1.msra.mxu0 %v1054
        %1431 = vmatprep.subr.mxu0 0.0
        %1432 = vmatpush1.msra.mxu0 %v1055
        %1433 = vmatprep.subr.mxu0 0.0
        %1434 = vmatpush1.msra.mxu0 %v1056
        %1435 = vmatprep.subr.mxu0 0.0
        %1436 = vmatpush1.msra.mxu0 %v1057
        %1437 = vmatprep.subr.mxu0 0.0
        %1438 = vmatpush1.msra.mxu0 %v1058
        %1439 = vmatprep.subr.mxu0 0.0
        %1440 = vmatpush1.msra.mxu0 %v1059
        %1441 = vmatprep.subr.mxu0 0.0
        %1442 = vmatpush1.msra.mxu0 %v1060
        %1443 = vmatprep.subr.mxu0 0.0
        %1444 = vmatpush1.msra.mxu0 %v1061
        %1445 = vmatprep.subr.mxu0 0.0
        %1446 = vmatpush1.msra.mxu0 %v1062
        %1447 = vmatprep.subr.mxu0 0.0
        %1448 = vmatpush1.msra.mxu0 %v1063
        %1449 = vmatprep.subr.mxu0 0.0
        %1450 = vmatpush1.msra.mxu0 %v1064
        %1451 = vmatprep.subr.mxu0 0.0
        %1452 = vmatpush1.msra.mxu0 %v1065
        %1453 = vmatprep.subr.mxu0 0.0
        %1454 = vmatpush1.msra.mxu0 %v1066
        %1455 = vmatprep.subr.mxu0 0.0
        %1456 = vmatpush1.msra.mxu0 %v1067
        %1457 = vmatprep.subr.mxu0 0.0
        %1458 = vmatpush1.msra.mxu0 %v1068
        %1459 = vmatprep.subr.mxu0 0.0
        %1460 = vmatpush1.msra.mxu0 %v1069
        %1461 = vmatprep.subr.mxu0 0.0
        %1462 = vmatpush1.msra.mxu0 %v1070
        %1463 = vmatprep.subr.mxu0 0.0
        %1464 = vmatpush1.msra.mxu0 %v1071
        %1465 = vmatprep.subr.mxu0 0.0
        %1466 = vmatpush1.msra.mxu0 %v1072
        %1467 = vmatprep.subr.mxu0 0.0
        %1468 = vmatpush1.msra.mxu0 %v1073
        %1469 = vmatprep.subr.mxu0 0.0
        %1470 = vmatpush1.msra.mxu0 %v1074
        %1471 = vmatprep.subr.mxu0 0.0
        %1472 = vmatpush1.msra.mxu0 %v1075
        %1473 = vmatprep.subr.mxu0 0.0
        %1474 = vmatpush1.msra.mxu0 %v1076
        %1475 = vmatprep.subr.mxu0 0.0
        %1476 = vmatpush1.msra.mxu0 %v1077
        %1477 = vmatprep.subr.mxu0 0.0
        %1478 = vmatpush1.msra.mxu0 %v1078
        %1479 = vmatprep.subr.mxu0 0.0
        %1480 = vmatpush1.msra.mxu0 %v1079
        %1481 = vmatprep.subr.mxu0 0.0
        %1482 = vmatpush1.msra.mxu0 %v1080
        %1483 = vmatprep.mubr.f32.mxu0 %v888
        %1484 = vmatmul.mubr.f32.gmra.mrb[0].mxu0 %v887
        %v1485 = vpop.f32.mrb[0].mxu0
        %v1486 = vadd.f32 %v1381, %v1485
        %v1487 = vpop.f32.mrb[0].mxu0
        %1488 = vmatprep.mubr.f32.mxu0 %v897
        %1489 = vmatmul.mubr.f32.gmra.mrb[0].mxu0 %v896
        %v1490 = vpop.f32.mrb[0].mxu0
        %v1491 = vadd.f32 %v1386, %v1490
        %v1492 = vpop.f32.mrb[0].mxu0
        %1493 = vmatprep.mubr.f32.mxu0 %v906
        %1494 = vmatmul.mubr.f32.gmra.mrb[0].mxu0 %v905
        %v1495 = vpop.f32.mrb[0].mxu0
        %v1496 = vadd.f32 %v1391, %v1495
        %v1497 = vpop.f32.mrb[0].mxu0
        %1498 = vmatprep.mubr.f32.mxu0 %v915
        %1499 = vmatmul.mubr.f32.gmra.mrb[0].mxu0 %v914
        %v1500 = vpop.f32.mrb[0].mxu0
        %v1501 = vadd.f32 %v1396, %v1500
        %v1502 = vpop.f32.mrb[0].mxu0
        %1503 = vmatprep.mubr.f32.mxu0 %v924
        %1504 = vmatmul.mubr.f32.gmra.mrb[0].mxu0 %v923
        %v1505 = vpop.f32.mrb[0].mxu0
        %v1506 = vadd.f32 %v1401, %v1505
        %v1507 = vpop.f32.mrb[0].mxu0
        %1508 = vmatprep.mubr.f32.mxu0 %v933
        %1509 = vmatmul.mubr.f32.gmra.mrb[0].mxu0 %v932
        %v1510 = vpop.f32.mrb[0].mxu0
        %v1511 = vadd.f32 %v1406, %v1510
        %v1512 = vpop.f32.mrb[0].mxu0
        %1513 = vmatprep.mubr.f32.mxu0 %v942
        %1514 = vmatmul.mubr.f32.gmra.mrb[0].mxu0 %v941
        %v1515 = vpop.f32.mrb[0].mxu0
        %v1516 = vadd.f32 %v1411, %v1515
        %v1517 = vpop.f32.mrb[0].mxu0
        %1518 = vmatprep.mubr.f32.mxu0 %v951
        %1519 = vmatmul.mubr.f32.gmra.mrb[0].mxu0 %v950
        %v1520 = vpop.f32.mrb[0].mxu0
        %v1521 = vadd.f32 %v1416, %v1520
        %v1522 = vpop.f32.mrb[0].mxu0
        %1523 = vdwg.mxu0
        %1524 = vmatprep.subr.mxu0 0.0
        %1525 = vmatpush1.msra.mxu0 %v1081
        %1526 = vmatprep.subr.mxu0 0.0
        %1527 = vmatpush1.msra.mxu0 %v1082
        %1528 = vmatprep.subr.mxu0 0.0
        %1529 = vmatpush1.msra.mxu0 %v1083
        %1530 = vmatprep.subr.mxu0 0.0
        %1531 = vmatpush1.msra.mxu0 %v1084
        %1532 = vmatprep.subr.mxu0 0.0
        %1533 = vmatpush1.msra.mxu0 %v1085
        %1534 = vmatprep.subr.mxu0 0.0
        %1535 = vmatpush1.msra.mxu0 %v1086
        %1536 = vmatprep.subr.mxu0 0.0
        %1537 = vmatpush1.msra.mxu0 %v1087
        %1538 = vmatprep.subr.mxu0 0.0
        %1539 = vmatpush1.msra.mxu0 %v1088
        %1540 = vmatprep.subr.mxu0 0.0
        %1541 = vmatpush1.msra.mxu0 %v1089
        %1542 = vmatprep.subr.mxu0 0.0
        %1543 = vmatpush1.msra.mxu0 %v1090
        %1544 = vmatprep.subr.mxu0 0.0
        %1545 = vmatpush1.msra.mxu0 %v1091
        %1546 = vmatprep.subr.mxu0 0.0
        %1547 = vmatpush1.msra.mxu0 %v1092
        %1548 = vmatprep.subr.mxu0 0.0
        %1549 = vmatpush1.msra.mxu0 %v1093
        %1550 = vmatprep.subr.mxu0 0.0
        %1551 = vmatpush1.msra.mxu0 %v1094
        %1552 = vmatprep.subr.mxu0 0.0
        %1553 = vmatpush1.msra.mxu0 %v1095
        %1554 = vmatprep.subr.mxu0 0.0
        %1555 = vmatpush1.msra.mxu0 %v1096
        %1556 = vmatprep.subr.mxu0 0.0
        %1557 = vmatpush1.msra.mxu0 0.0
        %1558 = vmatprep.subr.mxu0 0.0
        %1559 = vmatpush1.msra.mxu0 0.0
        %1560 = vmatprep.subr.mxu0 0.0
        %1561 = vmatpush1.msra.mxu0 0.0
        %1562 = vmatprep.subr.mxu0 0.0
        %1563 = vmatpush1.msra.mxu0 0.0
        %1564 = vmatprep.subr.mxu0 0.0
        %1565 = vmatpush1.msra.mxu0 0.0
        %1566 = vmatprep.subr.mxu0 0.0
        %1567 = vmatpush1.msra.mxu0 0.0
        %1568 = vmatprep.subr.mxu0 0.0
        %1569 = vmatpush1.msra.mxu0 0.0
        %1570 = vmatprep.subr.mxu0 0.0
        %1571 = vmatpush1.msra.mxu0 0.0
        %1572 = vmatprep.subr.mxu0 0.0
        %1573 = vmatpush1.msra.mxu0 0.0
        %1574 = vmatprep.subr.mxu0 0.0
        %1575 = vmatpush1.msra.mxu0 0.0
        %1576 = vmatprep.subr.mxu0 0.0
        %1577 = vmatpush1.msra.mxu0 0.0
        %1578 = vmatprep.subr.mxu0 0.0
        %1579 = vmatpush1.msra.mxu0 0.0
        %1580 = vmatprep.subr.mxu0 0.0
        %1581 = vmatpush1.msra.mxu0 0.0
        %1582 = vmatprep.subr.mxu0 0.0
        %1583 = vmatpush1.msra.mxu0 0.0
        %1584 = vmatprep.subr.mxu0 0.0
        %1585 = vmatpush1.msra.mxu0 0.0
        %1586 = vmatprep.subr.mxu0 0.0
        %1587 = vmatpush1.msra.mxu0 0.0
        %1588 = vmatprep.mubr.f32.mxu0 0.0
        %1589 = vmatmul.mubr.f32.gmra.mrb[0].mxu0 %v889
        %v1590 = vpop.f32.mrb[0].mxu0
        %v1591 = vadd.f32 %v1486, %v1590
        %v1592 = vpop.f32.mrb[0].mxu0
        %1593 = vmatprep.mubr.f32.mxu0 0.0
        %1594 = vmatmul.mubr.f32.gmra.mrb[0].mxu0 %v898
        %v1595 = vpop.f32.mrb[0].mxu0
        %v1596 = vadd.f32 %v1491, %v1595
        %v1597 = vpop.f32.mrb[0].mxu0
        %1598 = vmatprep.mubr.f32.mxu0 0.0
        %1599 = vmatmul.mubr.f32.gmra.mrb[0].mxu0 %v907
        %v1600 = vpop.f32.mrb[0].mxu0
        %v1601 = vadd.f32 %v1496, %v1600
        %v1602 = vpop.f32.mrb[0].mxu0
        %1603 = vmatprep.mubr.f32.mxu0 0.0
        %1604 = vmatmul.mubr.f32.gmra.mrb[0].mxu0 %v916
        %v1605 = vpop.f32.mrb[0].mxu0
        %v1606 = vadd.f32 %v1501, %v1605
        %v1607 = vpop.f32.mrb[0].mxu0
        %1608 = vmatprep.mubr.f32.mxu0 0.0
        %1609 = vmatmul.mubr.f32.gmra.mrb[0].mxu0 %v925
        %v1610 = vpop.f32.mrb[0].mxu0
        %v1611 = vadd.f32 %v1506, %v1610
        %v1612 = vpop.f32.mrb[0].mxu0
        %1613 = vmatprep.mubr.f32.mxu0 0.0
        %1614 = vmatmul.mubr.f32.gmra.mrb[0].mxu0 %v934
        %v1615 = vpop.f32.mrb[0].mxu0
        %v1616 = vadd.f32 %v1511, %v1615
        %v1617 = vpop.f32.mrb[0].mxu0
        %1618 = vmatprep.mubr.f32.mxu0 0.0
        %1619 = vmatmul.mubr.f32.gmra.mrb[0].mxu0 %v943
        %v1620 = vpop.f32.mrb[0].mxu0
        %v1621 = vadd.f32 %v1516, %v1620
        %v1622 = vpop.f32.mrb[0].mxu0
        %1623 = vmatprep.mubr.f32.mxu0 0.0
        %1624 = vmatmul.mubr.f32.gmra.mrb[0].mxu0 %v952
        %v1625 = vpop.f32.mrb[0].mxu0
        %v1626 = vadd.f32 %v1521, %v1625
        %v1627 = vpop.f32.mrb[0].mxu0
        %1628 = vdwg.mxu0
        %v1629 = vmax.f32 %v1591, 0.0
        %v1630 = vmax.f32 %v1596, 0.0
        %v1631 = vmax.f32 %v1601, 0.0
        %v1632 = vmax.f32 %v1606, 0.0
        %v1633 = vmax.f32 %v1611, 0.0
        %v1634 = vmax.f32 %v1616, 0.0
        %v1635 = vmax.f32 %v1621, 0.0
        %v1636 = vmax.f32 %v1626, 0.0
        %v1637 = vld [vmem:[%s5] sm:$0xff]
        %v1638 = vld [vmem:[%s5 + $0x8] sm:$0xff]
        %v1639 = vld [vmem:[%s5 + $0x10] sm:$0xff]
        %v1640 = vld [vmem:[%s5 + $0x18] sm:$0xff]
        %v1641 = vld [vmem:[%s5 + $0x20] sm:$0xff]
        %v1642 = vld [vmem:[%s5 + $0x28] sm:$0xff]
        %v1643 = vld [vmem:[%s5 + $0x30] sm:$0xff]
        %v1644 = vld [vmem:[%s5 + $0x38] sm:$0xff]
        %v1645 = vld [vmem:[%s5 + $0x40] sm:$0xff]
        %v1646 = vld [vmem:[%s5 + $0x48] sm:$0xff]
        %v1647 = vld [vmem:[%s5 + $0x50] sm:$0xff]
        %v1648 = vld [vmem:[%s5 + $0x58] sm:$0xff]
        %v1649 = vld [vmem:[%s5 + $0x60] sm:$0xff]
        %v1650 = vld [vmem:[%s5 + $0x68] sm:$0xff]
        %v1651 = vld [vmem:[%s5 + $0x70] sm:$0xff]
        %v1652 = vld [vmem:[%s5 + $0x78] sm:$0xff]
        %v1653 = vld [vmem:[%s6] sm:$0x1]
        %v1655 = vlaneseq
        %v1656 = vshrl.u32 %v1655, 7
        %v1657 = vsub.s32 0, %v1656
        %v1658 = vrot.slane %v1653, %v1657
        %1660 = vmatprep.subr.mxu0 0.0
        %1661 = vmatpush1.msra.mxu0 %v1637
        %1662 = vmatprep.subr.mxu0 0.0
        %1663 = vmatpush1.msra.mxu0 %v1638
        %1664 = vmatprep.subr.mxu0 0.0
        %1665 = vmatpush1.msra.mxu0 %v1639
        %1666 = vmatprep.subr.mxu0 0.0
        %1667 = vmatpush1.msra.mxu0 %v1640
        %1668 = vmatprep.subr.mxu0 0.0
        %1669 = vmatpush1.msra.mxu0 %v1641
        %1670 = vmatprep.subr.mxu0 0.0
        %1671 = vmatpush1.msra.mxu0 %v1642
        %1672 = vmatprep.subr.mxu0 0.0
        %1673 = vmatpush1.msra.mxu0 %v1643
        %1674 = vmatprep.subr.mxu0 0.0
        %1675 = vmatpush1.msra.mxu0 %v1644
        %1676 = vmatprep.subr.mxu0 0.0
        %1677 = vmatpush1.msra.mxu0 %v1645
        %1678 = vmatprep.subr.mxu0 0.0
        %1679 = vmatpush1.msra.mxu0 %v1646
        %1680 = vmatprep.subr.mxu0 0.0
        %1681 = vmatpush1.msra.mxu0 %v1647
        %1682 = vmatprep.subr.mxu0 0.0
        %1683 = vmatpush1.msra.mxu0 %v1648
        %1684 = vmatprep.subr.mxu0 0.0
        %1685 = vmatpush1.msra.mxu0 %v1649
        %1686 = vmatprep.subr.mxu0 0.0
        %1687 = vmatpush1.msra.mxu0 %v1650
        %1688 = vmatprep.subr.mxu0 0.0
        %1689 = vmatpush1.msra.mxu0 %v1651
        %1690 = vmatprep.subr.mxu0 0.0
        %1691 = vmatpush1.msra.mxu0 %v1652
        %1692 = vmatprep.subr.mxu0 0.0
        %1693 = vmatpush1.msra.mxu0 0.0
        %1694 = vmatprep.subr.mxu0 0.0
        %1695 = vmatpush1.msra.mxu0 0.0
        %1696 = vmatprep.subr.mxu0 0.0
        %1697 = vmatpush1.msra.mxu0 0.0
        %1698 = vmatprep.subr.mxu0 0.0
        %1699 = vmatpush1.msra.mxu0 0.0
        %1700 = vmatprep.subr.mxu0 0.0
        %1701 = vmatpush1.msra.mxu0 0.0
        %1702 = vmatprep.subr.mxu0 0.0
        %1703 = vmatpush1.msra.mxu0 0.0
        %1704 = vmatprep.subr.mxu0 0.0
        %1705 = vmatpush1.msra.mxu0 0.0
        %1706 = vmatprep.subr.mxu0 0.0
        %1707 = vmatpush1.msra.mxu0 0.0
        %1708 = vmatprep.subr.mxu0 0.0
        %1709 = vmatpush1.msra.mxu0 0.0
        %1710 = vmatprep.subr.mxu0 0.0
        %1711 = vmatpush1.msra.mxu0 0.0
        %1712 = vmatprep.subr.mxu0 0.0
        %1713 = vmatpush1.msra.mxu0 0.0
        %1714 = vmatprep.subr.mxu0 0.0
        %1715 = vmatpush1.msra.mxu0 0.0
        %1716 = vmatprep.subr.mxu0 0.0
        %1717 = vmatpush1.msra.mxu0 0.0
        %1718 = vmatprep.subr.mxu0 0.0
        %1719 = vmatpush1.msra.mxu0 0.0
        %1720 = vmatprep.subr.mxu0 0.0
        %1721 = vmatpush1.msra.mxu0 0.0
        %1722 = vmatprep.subr.mxu0 0.0
        %1723 = vmatpush1.msra.mxu0 0.0
        %1724 = vmatprep.mubr.f32.mxu0 0.0
        %1725 = vmatmul.mubr.f32.gmra.mrb[0].mxu0 %v1629
        %v1726 = vpop.f32.mrb[0].mxu0
        %v1727 = vadd.f32 %v1658, %v1726
        %v1728 = vpop.f32.mrb[0].mxu0
        %1729 = vmatprep.mubr.f32.mxu0 0.0
        %1730 = vmatmul.mubr.f32.gmra.mrb[0].mxu0 %v1630
        %v1731 = vpop.f32.mrb[0].mxu0
        %v1732 = vadd.f32 %v1658, %v1731
        %v1733 = vpop.f32.mrb[0].mxu0
        %1734 = vmatprep.mubr.f32.mxu0 0.0
        %1735 = vmatmul.mubr.f32.gmra.mrb[0].mxu0 %v1631
        %v1736 = vpop.f32.mrb[0].mxu0
        %v1737 = vadd.f32 %v1658, %v1736
        %v1738 = vpop.f32.mrb[0].mxu0
        %1739 = vmatprep.mubr.f32.mxu0 0.0
        %1740 = vmatmul.mubr.f32.gmra.mrb[0].mxu0 %v1632
        %v1741 = vpop.f32.mrb[0].mxu0
        %v1742 = vadd.f32 %v1658, %v1741
        %v1743 = vpop.f32.mrb[0].mxu0
        %1744 = vmatprep.mubr.f32.mxu0 0.0
        %1745 = vmatmul.mubr.f32.gmra.mrb[0].mxu0 %v1633
        %v1746 = vpop.f32.mrb[0].mxu0
        %v1747 = vadd.f32 %v1658, %v1746
        %v1748 = vpop.f32.mrb[0].mxu0
        %1749 = vmatprep.mubr.f32.mxu0 0.0
        %1750 = vmatmul.mubr.f32.gmra.mrb[0].mxu0 %v1634
        %v1751 = vpop.f32.mrb[0].mxu0
        %v1752 = vadd.f32 %v1658, %v1751
        %v1753 = vpop.f32.mrb[0].mxu0
        %1754 = vmatprep.mubr.f32.mxu0 0.0
        %1755 = vmatmul.mubr.f32.gmra.mrb[0].mxu0 %v1635
        %v1756 = vpop.f32.mrb[0].mxu0
        %v1757 = vadd.f32 %v1658, %v1756
        %v1758 = vpop.f32.mrb[0].mxu0
        %1759 = vmatprep.mubr.f32.mxu0 0.0
        %1760 = vmatmul.mubr.f32.gmra.mrb[0].mxu0 %v1636
        %v1761 = vpop.f32.mrb[0].mxu0
        %v1762 = vadd.f32 %v1658, %v1761
        %v1763 = vpop.f32.mrb[0].mxu0
        %1764 = vdwg.mxu0
        %v1765 = vld [vmem:[%s7] sm:$0xff]
        %v1766 = vld [vmem:[%s7 + $0x8] sm:$0xff]
        %v1767 = vld [vmem:[%s7 + $0x10] sm:$0xff]
        %v1768 = vld [vmem:[%s7 + $0x18] sm:$0xff]
        %v1769 = vld [vmem:[%s7 + $0x20] sm:$0xff]
        %v1770 = vld [vmem:[%s7 + $0x28] sm:$0xff]
        %v1771 = vld [vmem:[%s7 + $0x30] sm:$0xff]
        %v1772 = vld [vmem:[%s7 + $0x38] sm:$0xff]
        %v1773 = vld [vmem:[%s7 + $0x40] sm:$0xff]
        %v1774 = vld [vmem:[%s7 + $0x48] sm:$0xff]
        %v1775 = vld [vmem:[%s7 + $0x50] sm:$0xff]
        %v1776 = vld [vmem:[%s7 + $0x58] sm:$0xff]
        %v1777 = vld [vmem:[%s7 + $0x60] sm:$0xff]
        %v1778 = vld [vmem:[%s7 + $0x68] sm:$0xff]
        %v1779 = vld [vmem:[%s7 + $0x70] sm:$0xff]
        %v1780 = vld [vmem:[%s7 + $0x78] sm:$0xff]
        %v1781 = vld [vmem:[%s8] sm:$0x1]
        %v1783 = vlaneseq
        %v1784 = vshrl.u32 %v1783, 7
        %v1785 = vsub.s32 0, %v1784
        %v1786 = vrot.slane %v1781, %v1785
        %1788 = vmatprep.subr.mxu0 0.0
        %1789 = vmatpush1.msra.mxu0 %v1765
        %1790 = vmatprep.subr.mxu0 0.0
        %1791 = vmatpush1.msra.mxu0 %v1766
        %1792 = vmatprep.subr.mxu0 0.0
        %1793 = vmatpush1.msra.mxu0 %v1767
        %1794 = vmatprep.subr.mxu0 0.0
        %1795 = vmatpush1.msra.mxu0 %v1768
        %1796 = vmatprep.subr.mxu0 0.0
        %1797 = vmatpush1.msra.mxu0 %v1769
        %1798 = vmatprep.subr.mxu0 0.0
        %1799 = vmatpush1.msra.mxu0 %v1770
        %1800 = vmatprep.subr.mxu0 0.0
        %1801 = vmatpush1.msra.mxu0 %v1771
        %1802 = vmatprep.subr.mxu0 0.0
        %1803 = vmatpush1.msra.mxu0 %v1772
        %1804 = vmatprep.subr.mxu0 0.0
        %1805 = vmatpush1.msra.mxu0 %v1773
        %1806 = vmatprep.subr.mxu0 0.0
        %1807 = vmatpush1.msra.mxu0 %v1774
        %1808 = vmatprep.subr.mxu0 0.0
        %1809 = vmatpush1.msra.mxu0 %v1775
        %1810 = vmatprep.subr.mxu0 0.0
        %1811 = vmatpush1.msra.mxu0 %v1776
        %1812 = vmatprep.subr.mxu0 0.0
        %1813 = vmatpush1.msra.mxu0 %v1777
        %1814 = vmatprep.subr.mxu0 0.0
        %1815 = vmatpush1.msra.mxu0 %v1778
        %1816 = vmatprep.subr.mxu0 0.0
        %1817 = vmatpush1.msra.mxu0 %v1779
        %1818 = vmatprep.subr.mxu0 0.0
        %1819 = vmatpush1.msra.mxu0 %v1780
        %1820 = vmatprep.subr.mxu0 0.0
        %1821 = vmatpush1.msra.mxu0 0.0
        %1822 = vmatprep.subr.mxu0 0.0
        %1823 = vmatpush1.msra.mxu0 0.0
        %1824 = vmatprep.subr.mxu0 0.0
        %1825 = vmatpush1.msra.mxu0 0.0
        %1826 = vmatprep.subr.mxu0 0.0
        %1827 = vmatpush1.msra.mxu0 0.0
        %1828 = vmatprep.subr.mxu0 0.0
        %1829 = vmatpush1.msra.mxu0 0.0
        %1830 = vmatprep.subr.mxu0 0.0
        %1831 = vmatpush1.msra.mxu0 0.0
        %1832 = vmatprep.subr.mxu0 0.0
        %1833 = vmatpush1.msra.mxu0 0.0
        %1834 = vmatprep.subr.mxu0 0.0
        %1835 = vmatpush1.msra.mxu0 0.0
        %1836 = vmatprep.subr.mxu0 0.0
        %1837 = vmatpush1.msra.mxu0 0.0
        %1838 = vmatprep.subr.mxu0 0.0
        %1839 = vmatpush1.msra.mxu0 0.0
        %1840 = vmatprep.subr.mxu0 0.0
        %1841 = vmatpush1.msra.mxu0 0.0
        %1842 = vmatprep.subr.mxu0 0.0
        %1843 = vmatpush1.msra.mxu0 0.0
        %1844 = vmatprep.subr.mxu0 0.0
        %1845 = vmatpush1.msra.mxu0 0.0
        %1846 = vmatprep.subr.mxu0 0.0
        %1847 = vmatpush1.msra.mxu0 0.0
        %1848 = vmatprep.subr.mxu0 0.0
        %1849 = vmatpush1.msra.mxu0 0.0
        %1850 = vmatprep.subr.mxu0 0.0
        %1851 = vmatpush1.msra.mxu0 0.0
        %1852 = vmatprep.mubr.f32.mxu0 0.0
        %1853 = vmatmul.mubr.f32.gmra.mrb[0].mxu0 %v487
        %v1854 = vpop.f32.mrb[0].mxu0
        %v1855 = vadd.f32 %v1786, %v1854
        %v1856 = vpop.f32.mrb[0].mxu0
        %1857 = vmatprep.mubr.f32.mxu0 0.0
        %1858 = vmatmul.mubr.f32.gmra.mrb[0].mxu0 %v488
        %v1859 = vpop.f32.mrb[0].mxu0
        %v1860 = vadd.f32 %v1786, %v1859
        %v1861 = vpop.f32.mrb[0].mxu0
        %1862 = vmatprep.mubr.f32.mxu0 0.0
        %1863 = vmatmul.mubr.f32.gmra.mrb[0].mxu0 %v489
        %v1864 = vpop.f32.mrb[0].mxu0
        %v1865 = vadd.f32 %v1786, %v1864
        %v1866 = vpop.f32.mrb[0].mxu0
        %1867 = vmatprep.mubr.f32.mxu0 0.0
        %1868 = vmatmul.mubr.f32.gmra.mrb[0].mxu0 %v490
        %v1869 = vpop.f32.mrb[0].mxu0
        %v1870 = vadd.f32 %v1786, %v1869
        %v1871 = vpop.f32.mrb[0].mxu0
        %1872 = vmatprep.mubr.f32.mxu0 0.0
        %1873 = vmatmul.mubr.f32.gmra.mrb[0].mxu0 %v491
        %v1874 = vpop.f32.mrb[0].mxu0
        %v1875 = vadd.f32 %v1786, %v1874
        %v1876 = vpop.f32.mrb[0].mxu0
        %1877 = vmatprep.mubr.f32.mxu0 0.0
        %1878 = vmatmul.mubr.f32.gmra.mrb[0].mxu0 %v492
        %v1879 = vpop.f32.mrb[0].mxu0
        %v1880 = vadd.f32 %v1786, %v1879
        %v1881 = vpop.f32.mrb[0].mxu0
        %1882 = vmatprep.mubr.f32.mxu0 0.0
        %1883 = vmatmul.mubr.f32.gmra.mrb[0].mxu0 %v493
        %v1884 = vpop.f32.mrb[0].mxu0
        %v1885 = vadd.f32 %v1786, %v1884
        %v1886 = vpop.f32.mrb[0].mxu0
        %1887 = vmatprep.mubr.f32.mxu0 0.0
        %1888 = vmatmul.mubr.f32.gmra.mrb[0].mxu0 %v494
        %v1889 = vpop.f32.mrb[0].mxu0
        %v1890 = vadd.f32 %v1786, %v1889
        %v1891 = vpop.f32.mrb[0].mxu0
        %1892 = vdwg.mxu0
        %v1893 = vadd.f32 %v1727, %v1855
        %v1894 = vadd.f32 %v1732, %v1860
        %v1895 = vadd.f32 %v1737, %v1865
        %v1896 = vadd.f32 %v1742, %v1870
        %v1897 = vadd.f32 %v1747, %v1875
        %v1898 = vadd.f32 %v1752, %v1880
        %v1899 = vadd.f32 %v1757, %v1885
        %v1900 = vadd.f32 %v1762, %v1890
        %v1901 = vmax.f32 %v1893, 0.0
        %v1902 = vmax.f32 %v1894, 0.0
        %v1903 = vmax.f32 %v1895, 0.0
        %v1904 = vmax.f32 %v1896, 0.0
        %v1905 = vmax.f32 %v1897, 0.0
        %v1906 = vmax.f32 %v1898, 0.0
        %v1907 = vmax.f32 %v1899, 0.0
        %v1908 = vmax.f32 %v1900, 0.0
        %1909 = vst [vmem:[%s298] sm:$0xff] %v1901
        %1910 = vst [vmem:[%s298 + $0x8] sm:$0xff] %v1902
        %1911 = vst [vmem:[%s298 + $0x10] sm:$0xff] %v1903
        %1912 = vst [vmem:[%s298 + $0x18] sm:$0xff] %v1904
        %1913 = vst [vmem:[%s298 + $0x20] sm:$0xff] %v1905
        %1914 = vst [vmem:[%s298 + $0x28] sm:$0xff] %v1906
        %1915 = vst [vmem:[%s298 + $0x30] sm:$0xff] %v1907
        %1916 = vst [vmem:[%s298 + $0x38] sm:$0xff] %v1908
        %s1917 = sand.u32 %s213, 1
        %s1918 = scalar_lea.sflag [#allocation7], %s1917
        %s1919 = sand.u32 %s213, 1
        %s1920 = smul.addr %s1919, 64
        %s1921 = scalar_lea.vmem [#allocation6], %s1920
        // Predicated region
        $region137: #{bottleneck_b_pallas.1} parent=51 // pred_check
          %p1922 = pneg %p223
        $region138: #{bottleneck_b_pallas.1} parent=51 // pred_check_branch
          %1924 = sbr.rel (%p1922) target = $region140
        $region139: #{bottleneck_b_pallas.1} parent=51 // pred_region
          %s1925 = smul.u32 8, %s28
          %s1927 = ssub.s32 1024, 1024
          %1928 = vsyncadd %s1918, %s1927
          %s1929 = smul.addr %s27, 32
          %s1930 = sadd.s32 %s1925, %s1929
          %s1931 = smul.addr %s1930, 128
          %s1932 = scalar_lea.hbm %s9, %s1931
          %s1933 = sshll.u32 %s1921, 4
          %s1934 = int_to_ptr.vmem [resolvable:$true] %s1933
          %1939 = dma.vmem_to_hbm [thread:$0]  %s1934, 1024, %s1932, %s1918, 128, 128, 8
        $region140: #{bottleneck_b_pallas.1} parent=51 // pred_fallthru
          _
      $region52: #{bottleneck_b_pallas.1} parent=5 // pred_fallthru
        _
      %p1940 = scmp.le.s32.totalorder 2, %s18
      // Predicated region
      $region141: #{bottleneck_b_pallas.1} parent=5 // pred_check
        %p1941 = pneg %p1940
      $region142: #{bottleneck_b_pallas.1} parent=5 // pred_check_branch
        %1943 = sbr.rel (%p1941) target = $region144
      $region143: #{bottleneck_b_pallas.1} parent=5 // pred_region
        %s1944 = ssub.s32 %s18, 2
        // Predicated region
        $region145: #{bottleneck_b_pallas.1} parent=143 // pred_check
          %p1945 = pneg %p229
        $region146: #{bottleneck_b_pallas.1} parent=143 // pred_check_branch
          %1947 = sbr.rel (%p1945) target = $region148
        $region147: #{bottleneck_b_pallas.1} parent=143 // pred_region
          %s1948 = sand.u32 %s214, 1
          %s1949 = scalar_lea.sflag [#allocation7], %s1948
          %s1950 = sand.u32 %s214, 1
          %s1951 = smul.addr %s1950, 64
          %s1952 = scalar_lea.vmem [#allocation6], %s1951
          %1953 = dma.done %s1949, 1024
        $region148: #{bottleneck_b_pallas.1} parent=143 // pred_fallthru
          _
      $region144: #{bottleneck_b_pallas.1} parent=5 // pred_fallthru
        _
    $region6: #{bottleneck_b_pallas.1} parent=1 // loop_footer
      %s22 = sadd.s32 1, %s18
    $region7: #{bottleneck_b_pallas.1} parent=1 // loop_footer_branch
      %17 = sbr.rel target = $region3
    $region8: #{bottleneck_b_pallas.1} parent=1 // loop_exit
      _
    %1954 = vsyncpa [#allocation7], 1
    %s1955 = scalar_lea.sflag [#allocation7], 1
    %1956 = vsyncpa %s1955, 1
  %1957 = vsyncmov [#allocation3]
  %s1958 = vpop.sfrf %1957
  %p1959 = scmp.eq.s32.totalorder %s1958, 0
  %p1960 = pneg %p1959
  %1962 = shalt.err (%p1960)
  %s1963 = scalar_lea.sflag [#allocation3], 1
  %1964 = vsyncmov %s1963
  %s1965 = vpop.sfrf %1964
  %p1966 = scmp.eq.s32.totalorder %s1965, 0
  %p1967 = pneg %p1966
  %1969 = shalt.err (%p1967)

</llo_original>
